<compile_context>
chip_gen: v5e
topology: v5e:2x2
jax: 0.10.0
libtpu: 0.0.40
codegen_flags: <defaults>
</compile_context>

<pallas_src>
import functools

import jax
import jax.numpy as jnp
from jax.experimental import pallas as pl
from jax.experimental.pallas import tpu as pltpu

BN_EPS = 1e-3
LANE = 128


def _round_up(n, m):
    return ((n + m - 1) // m) * m


def _choose_chunk_rows(Ho, Wo):
    """Smallest TH dividing Ho with TH*Wo a multiple of 8 and >= 128 matmul rows."""
    for th in range(1, Ho + 1):
        if Ho % th == 0 and (th * Wo) % 8 == 0 and th * Wo >= 128:
            return th
    return Ho


# ---------------------------------------------------------------------------
# Fused Pallas kernel: depthwise 3x3 + pointwise 1x1 (MXU, bf16) + affine (+ swish)
# ---------------------------------------------------------------------------
def _sep_conv_kernel(x_ref, dww_ref, pww_ref, scale_ref, shift_ref, o_ref,
                     *, Ho, Wo, TH, activation):
    # x_ref:     (1, Ho+2, Wo+2, Cin)  padded NHWC tile for one image (f32, VMEM)
    # dww_ref:   (9, Cin)              depthwise taps, kh-major / kw-minor (f32)
    # pww_ref:   (Cin, Cop)            pointwise weight (bf16)
    # scale_ref: (1, Cop)              fused BN scale (or ones), f32
    # shift_ref: (1, Cop)              fused (bias - mean)*scale + beta (or bias), f32
    # o_ref:     (1, Ho*Wo, Cop)       f32, lane-dense
    cin = x_ref.shape[-1]
    dww = dww_ref[...]
    pww = pww_ref[...]
    scale = scale_ref[...]
    shift = shift_ref[...]

    n_chunks = Ho // TH
    # Static unroll: chunk c+1's depthwise FMAs (VPU) overlap chunk c's matmul (MXU)
    # and epilogue (VALU/EUP) — different VLIW slots, one basic block.
    for c in range(n_chunks):
        r0 = c * TH
        band = x_ref[0, r0:r0 + TH + 2, :, :]                  # (TH+2, Wp, Cin)
        # One W-shift per kw: kw=0 is start-aligned, only kw=1,2 cost a sublane
        # relayout (2 passes per chunk instead of 6 misaligned slices).
        xs = [band[:, kw:kw + Wo, :] for kw in range(3)]
        # Depthwise 3x3 stride-1, f32 accumulation; init with tap 0 (no zero fill).
        acc = xs[0][0:TH] * dww[0]
        for kh in range(3):
            for kw in range(3):
                if kh == 0 and kw == 0:
                    continue
                acc = acc + xs[kw][kh:kh + TH] * dww[kh * 3 + kw]
        # Pointwise 1x1 on the MXU: bf16 x bf16 operands, f32 accumulation.
        # (Wo is kept a multiple of 8 by the wrapper's chunk choice when chunking,
        #  so the (TH,Wo,Cin)->(TH*Wo,Cin) reshape is layout-preserving.)
        y = jnp.dot(acc.reshape(TH * Wo, cin).astype(jnp.bfloat16), pww,
                    preferred_element_type=jnp.float32)
        # Fused epilogue: pointwise bias + BatchNorm affine (+ optional swish).
        y = y * scale + shift
        if activation:  # MemoryEfficientSwish: y * sigmoid(y), EUP exp + fast recip
            y = y * pl.reciprocal(1.0 + jnp.exp(-y), approx=True)
        o_ref[0, r0 * Wo:(r0 + TH) * Wo, :] = y.astype(o_ref.dtype)


# ---------------------------------------------------------------------------
# Wrappers
# ---------------------------------------------------------------------------
def separable_conv_block_nhwc(x_nhwc, params, *, norm=True, activation=False):
    """Forward pass, channels-last. x_nhwc: (B, H, W, Cin) float32 -> (B, H, W, Cout)."""
    dw_w = params["dw_w"]            # (3, 3, Cin)
    pw_w = params["pw_w"]            # (Cin, Cout)
    pw_b = params["pw_b"]            # (Cout,)
    B, H, W, Cin = x_nhwc.shape
    Cout = pw_w.shape[1]
    Cop = _round_up(Cout, LANE)      # lane-pad OUTPUT channels only (dense stores)

    # Fold pointwise bias + eval-mode BatchNorm into one per-channel affine.
    if norm:
        scale = params["bn_gamma"] * jax.lax.rsqrt(params["bn_var"] + BN_EPS)
        shift = (pw_b - params["bn_mean"]) * scale + params["bn_beta"]
    else:
        scale = jnp.ones((Cout,), jnp.float32)
        shift = pw_b

    # TF static SAME pad for k=3, s=1 (1 px each side). No channel pad of the
    # activation in HBM: the kernel takes the true Cin (full-extent last dim).
    x_pad = jnp.pad(x_nhwc.astype(jnp.float32), ((0, 0), (1, 1), (1, 1), (0, 0)))

    dw_wp = dw_w.reshape(9, Cin).astype(jnp.float32)                       # (9, Cin)
    pw_wp = jnp.pad(pw_w, ((0, 0), (0, Cop - Cout))).astype(jnp.bfloat16)  # (Cin, Cop)
    scale_p = jnp.pad(scale, (0, Cop - Cout), constant_values=1.0
                      ).reshape(1, Cop).astype(jnp.float32)
    shift_p = jnp.pad(shift, (0, Cop - Cout)).reshape(1, Cop).astype(jnp.float32)

    Ho, Wo = H, W                    # stride-1 SAME padding
    Hp, Wp = H + 2, W + 2
    TH = _choose_chunk_rows(Ho, Wo)  # in-kernel H chunk (rows per MXU matmul)

    # Explicit scoped-VMEM budget (double-buffered blocks + params + live intermediates),
    # clamped to [32 MiB, 64 MiB] so it is valid on v5e/v6e/v7x.
    in_block = Hp * Wp * Cin * 4
    out_block = Ho * Wo * Cop * 4
    param_bytes = 9 * Cin * 4 + Cin * Cop * 2 + 2 * Cop * 4
    live = 4 * (TH + 2) * Wp * Cin * 4 + 2 * TH * Wo * Cop * 4
    vmem_need = 2 * (in_block + out_block) + 2 * param_bytes + live
    vmem_limit = int(min(max(2 * vmem_need, 32 << 20), 64 << 20))

    flops = B * Ho * Wo * (18 * Cin + 2 * Cin * Cop + 2 * Cop)
    bytes_accessed = (4 * B * Hp * Wp * Cin + 9 * Cin * 4 + Cin * Cop * 2
                      + 2 * Cop * 4 + 4 * B * Ho * Wo * Cop)
    transcendentals = B * Ho * Wo * Cop if activation else 0

    out = pl.pallas_call(
        functools.partial(_sep_conv_kernel, Ho=Ho, Wo=Wo, TH=TH,
                          activation=activation),
        out_shape=jax.ShapeDtypeStruct((B, Ho * Wo, Cop), jnp.float32),
        grid=(B,),
        in_specs=[
            pl.BlockSpec((1, Hp, Wp, Cin), lambda b: (b, 0, 0, 0)),
            pl.BlockSpec((9, Cin), lambda b: (0, 0)),
            pl.BlockSpec((Cin, Cop), lambda b: (0, 0)),
            pl.BlockSpec((1, Cop), lambda b: (0, 0)),
            pl.BlockSpec((1, Cop), lambda b: (0, 0)),
        ],
        out_specs=pl.BlockSpec((1, Ho * Wo, Cop), lambda b: (b, 0, 0)),
        compiler_params=pltpu.CompilerParams(
            dimension_semantics=("parallel",),
            vmem_limit_bytes=vmem_limit),
        cost_estimate=pl.CostEstimate(
            flops=int(flops),
            transcendentals=int(transcendentals),
            bytes_accessed=int(bytes_accessed)),
    )(x_pad, dw_wp, pw_wp, scale_p, shift_p)

    out = out.reshape(B, Ho, Wo, Cop)[..., :Cout]
    return out


def separable_conv_block(x_nchw, params, *, norm=True, activation=False):
    """PyTorch-interface forward pass. x_nchw: (B, Cin, H, W) float32 -> (B, Cout, H, W)."""
    x = jnp.transpose(x_nchw, (0, 2, 3, 1))
    y = separable_conv_block_nhwc(x, params, norm=norm, activation=activation)
    return jnp.transpose(y, (0, 3, 1, 2))


# ---------------------------------------------------------------------------
# Deterministic synthetic parameters + pure-JAX reference (correctness check)
# ---------------------------------------------------------------------------
def init_params(key, cin, cout):
    k1, k2, k3, k4, k5, k6, k7 = jax.random.split(key, 7)
    return {
        "dw_w": (jax.random.normal(k1, (3, 3, cin)) / 3.0).astype(jnp.float32),
        "pw_w": (jax.random.normal(k2, (cin, cout)) / jnp.sqrt(cin)).astype(jnp.float32),
        "pw_b": (0.1 * jax.random.normal(k3, (cout,))).astype(jnp.float32),
        "bn_gamma": (1.0 + 0.1 * jax.random.normal(k4, (cout,))).astype(jnp.float32),
        "bn_beta": (0.1 * jax.random.normal(k5, (cout,))).astype(jnp.float32),
        "bn_mean": (0.1 * jax.random.normal(k6, (cout,))).astype(jnp.float32),
        "bn_var": jnp.abs(1.0 + 0.1 * jax.random.normal(k7, (cout,))).astype(jnp.float32),
    }


def reference_forward(x_nchw, p, *, norm=True, activation=False):
    x = jnp.transpose(x_nchw, (0, 2, 3, 1)).astype(jnp.float32)
    dw = jax.lax.conv_general_dilated(
        x, p["dw_w"][:, :, None, :], window_strides=(1, 1),
        padding=((1, 1), (1, 1)),
        dimension_numbers=("NHWC", "HWIO", "NHWC"),
        feature_group_count=x.shape[-1])
    y = jnp.einsum("bhwc,co->bhwo", dw, p["pw_w"]) + p["pw_b"]
    if norm:
        y = (y - p["bn_mean"]) * jax.lax.rsqrt(p["bn_var"] + BN_EPS) * p["bn_gamma"] + p["bn_beta"]
    if activation:
        y = y * jax.nn.sigmoid(y)
    return jnp.transpose(y, (0, 3, 1, 2))


if __name__ == "__main__":
    key = jax.random.PRNGKey(0)
    kp, kx = jax.random.split(key)

    B, CIN, H, W = 2, 64, 16, 16      # SeparableConvBlock default: out_channels = in_channels
    COUT = CIN
    params = init_params(kp, CIN, COUT)
    x = jax.random.normal(kx, (B, CIN, H, W), dtype=jnp.float32)   # NCHW input

    for act in (False, True):
        fwd = jax.jit(functools.partial(separable_conv_block, norm=True, activation=act))
        out = fwd(x, params)
        jax.block_until_ready(out)

        assert out.shape == (B, COUT, H, W)
        assert bool(jnp.all(jnp.isfinite(out)))

        ref = reference_forward(x, params, norm=True, activation=act)
        max_err = float(jnp.max(jnp.abs(out - ref)))
        # bf16 MXU operands with f32 accumulation: tolerance loosened accordingly.
        assert bool(jnp.allclose(out, ref, atol=3e-2, rtol=3e-2)), max_err

    print("KERNEL_OK")
</pallas_src>

<mosaic_0001>
module attributes {stable_mosaic.version = 11 : i64} {
  func.func @_sep_conv_kernel(%arg0: i32, %arg1: memref<1x18x18x64xf32, #tpu.memory_space<vmem>>, %arg2: memref<9x64xf32, #tpu.memory_space<vmem>>, %arg3: memref<64x128xbf16, #tpu.memory_space<vmem>>, %arg4: memref<1x128xf32, #tpu.memory_space<vmem>>, %arg5: memref<1x128xf32, #tpu.memory_space<vmem>>, %arg6: memref<1x256x128xf32, #tpu.memory_space<vmem>>) attributes {dimension_semantics = [#tpu.dimension_semantics<parallel>], iteration_bounds = array<i64: 2>, scalar_prefetch = 0 : i64, scratch_operands = 0 : i64, tpu.core_type = #tpu.core_type<tc>, window_params = [{transform_indices = @transform_0, window_bounds = array<i64: 1, 18, 18, 64>}, {pipeline_mode = #tpu.pipeline_mode<synchronous>, transform_indices = @transform_1, window_bounds = array<i64: 9, 64>}, {pipeline_mode = #tpu.pipeline_mode<synchronous>, transform_indices = @transform_2, window_bounds = array<i64: 64, 128>}, {pipeline_mode = #tpu.pipeline_mode<synchronous>, transform_indices = @transform_3, window_bounds = array<i64: 1, 128>}, {pipeline_mode = #tpu.pipeline_mode<synchronous>, transform_indices = @transform_4, window_bounds = array<i64: 1, 128>}, {transform_indices = @transform_5, window_bounds = array<i64: 1, 256, 128>}]} {
    %c0 = arith.constant 0 : index
    %c0_0 = arith.constant 0 : index
    %0 = vector.load %arg2[%c0, %c0_0] : memref<9x64xf32, #tpu.memory_space<vmem>>, vector<9x64xf32>
    %c0_1 = arith.constant 0 : index
    %c0_2 = arith.constant 0 : index
    %1 = vector.load %arg3[%c0_1, %c0_2] : memref<64x128xbf16, #tpu.memory_space<vmem>>, vector<64x128xbf16>
    %c0_3 = arith.constant 0 : index
    %c0_4 = arith.constant 0 : index
    %2 = vector.load %arg4[%c0_3, %c0_4] : memref<1x128xf32, #tpu.memory_space<vmem>>, vector<1x128xf32>
    %c0_5 = arith.constant 0 : index
    %c0_6 = arith.constant 0 : index
    %3 = vector.load %arg5[%c0_5, %c0_6] : memref<1x128xf32, #tpu.memory_space<vmem>>, vector<1x128xf32>
    %c0_7 = arith.constant 0 : index
    %c0_8 = arith.constant 0 : index
    %c0_9 = arith.constant 0 : index
    %c0_10 = arith.constant 0 : index
    %4 = vector.load %arg1[%c0_7, %c0_8, %c0_9, %c0_10] : memref<1x18x18x64xf32, #tpu.memory_space<vmem>>, vector<1x10x18x64xf32>
    %5 = vector.shape_cast %4 : vector<1x10x18x64xf32> to vector<10x18x64xf32>
    %6 = vector.extract_strided_slice %5 {offsets = [0, 0, 0], sizes = [10, 16, 64], strides = [1, 1, 1]} : vector<10x18x64xf32> to vector<10x16x64xf32>
    %7 = vector.extract_strided_slice %5 {offsets = [0, 1, 0], sizes = [10, 16, 64], strides = [1, 1, 1]} : vector<10x18x64xf32> to vector<10x16x64xf32>
    %8 = vector.extract_strided_slice %5 {offsets = [0, 2, 0], sizes = [10, 16, 64], strides = [1, 1, 1]} : vector<10x18x64xf32> to vector<10x16x64xf32>
    %9 = vector.extract_strided_slice %6 {offsets = [0, 0, 0], sizes = [8, 16, 64], strides = [1, 1, 1]} : vector<10x16x64xf32> to vector<8x16x64xf32>
    %10 = vector.extract_strided_slice %0 {offsets = [0, 0], sizes = [1, 64], strides = [1, 1]} : vector<9x64xf32> to vector<1x64xf32>
    %11 = vector.shape_cast %10 : vector<1x64xf32> to vector<64xf32>
    %12 = vector.shape_cast %11 : vector<64xf32> to vector<1x1x64xf32>
    %13 = vector.broadcast %12 : vector<1x1x64xf32> to vector<8x16x64xf32>
    %14 = arith.mulf %9, %13 : vector<8x16x64xf32>
    %15 = vector.extract_strided_slice %7 {offsets = [0, 0, 0], sizes = [8, 16, 64], strides = [1, 1, 1]} : vector<10x16x64xf32> to vector<8x16x64xf32>
    %16 = vector.extract_strided_slice %0 {offsets = [1, 0], sizes = [1, 64], strides = [1, 1]} : vector<9x64xf32> to vector<1x64xf32>
    %17 = vector.shape_cast %16 : vector<1x64xf32> to vector<64xf32>
    %18 = vector.shape_cast %17 : vector<64xf32> to vector<1x1x64xf32>
    %19 = vector.broadcast %18 : vector<1x1x64xf32> to vector<8x16x64xf32>
    %20 = arith.mulf %15, %19 : vector<8x16x64xf32>
    %21 = arith.addf %14, %20 : vector<8x16x64xf32>
    %22 = vector.extract_strided_slice %8 {offsets = [0, 0, 0], sizes = [8, 16, 64], strides = [1, 1, 1]} : vector<10x16x64xf32> to vector<8x16x64xf32>
    %23 = vector.extract_strided_slice %0 {offsets = [2, 0], sizes = [1, 64], strides = [1, 1]} : vector<9x64xf32> to vector<1x64xf32>
    %24 = vector.shape_cast %23 : vector<1x64xf32> to vector<64xf32>
    %25 = vector.shape_cast %24 : vector<64xf32> to vector<1x1x64xf32>
    %26 = vector.broadcast %25 : vector<1x1x64xf32> to vector<8x16x64xf32>
    %27 = arith.mulf %22, %26 : vector<8x16x64xf32>
    %28 = arith.addf %21, %27 : vector<8x16x64xf32>
    %29 = vector.extract_strided_slice %6 {offsets = [1, 0, 0], sizes = [8, 16, 64], strides = [1, 1, 1]} : vector<10x16x64xf32> to vector<8x16x64xf32>
    %30 = vector.extract_strided_slice %0 {offsets = [3, 0], sizes = [1, 64], strides = [1, 1]} : vector<9x64xf32> to vector<1x64xf32>
    %31 = vector.shape_cast %30 : vector<1x64xf32> to vector<64xf32>
    %32 = vector.shape_cast %31 : vector<64xf32> to vector<1x1x64xf32>
    %33 = vector.broadcast %32 : vector<1x1x64xf32> to vector<8x16x64xf32>
    %34 = arith.mulf %29, %33 : vector<8x16x64xf32>
    %35 = arith.addf %28, %34 : vector<8x16x64xf32>
    %36 = vector.extract_strided_slice %7 {offsets = [1, 0, 0], sizes = [8, 16, 64], strides = [1, 1, 1]} : vector<10x16x64xf32> to vector<8x16x64xf32>
    %37 = vector.extract_strided_slice %0 {offsets = [4, 0], sizes = [1, 64], strides = [1, 1]} : vector<9x64xf32> to vector<1x64xf32>
    %38 = vector.shape_cast %37 : vector<1x64xf32> to vector<64xf32>
    %39 = vector.shape_cast %38 : vector<64xf32> to vector<1x1x64xf32>
    %40 = vector.broadcast %39 : vector<1x1x64xf32> to vector<8x16x64xf32>
    %41 = arith.mulf %36, %40 : vector<8x16x64xf32>
    %42 = arith.addf %35, %41 : vector<8x16x64xf32>
    %43 = vector.extract_strided_slice %8 {offsets = [1, 0, 0], sizes = [8, 16, 64], strides = [1, 1, 1]} : vector<10x16x64xf32> to vector<8x16x64xf32>
    %44 = vector.extract_strided_slice %0 {offsets = [5, 0], sizes = [1, 64], strides = [1, 1]} : vector<9x64xf32> to vector<1x64xf32>
    %45 = vector.shape_cast %44 : vector<1x64xf32> to vector<64xf32>
    %46 = vector.shape_cast %45 : vector<64xf32> to vector<1x1x64xf32>
    %47 = vector.broadcast %46 : vector<1x1x64xf32> to vector<8x16x64xf32>
    %48 = arith.mulf %43, %47 : vector<8x16x64xf32>
    %49 = arith.addf %42, %48 : vector<8x16x64xf32>
    %50 = vector.extract_strided_slice %6 {offsets = [2, 0, 0], sizes = [8, 16, 64], strides = [1, 1, 1]} : vector<10x16x64xf32> to vector<8x16x64xf32>
    %51 = vector.extract_strided_slice %0 {offsets = [6, 0], sizes = [1, 64], strides = [1, 1]} : vector<9x64xf32> to vector<1x64xf32>
    %52 = vector.shape_cast %51 : vector<1x64xf32> to vector<64xf32>
    %53 = vector.shape_cast %52 : vector<64xf32> to vector<1x1x64xf32>
    %54 = vector.broadcast %53 : vector<1x1x64xf32> to vector<8x16x64xf32>
    %55 = arith.mulf %50, %54 : vector<8x16x64xf32>
    %56 = arith.addf %49, %55 : vector<8x16x64xf32>
    %57 = vector.extract_strided_slice %7 {offsets = [2, 0, 0], sizes = [8, 16, 64], strides = [1, 1, 1]} : vector<10x16x64xf32> to vector<8x16x64xf32>
    %58 = vector.extract_strided_slice %0 {offsets = [7, 0], sizes = [1, 64], strides = [1, 1]} : vector<9x64xf32> to vector<1x64xf32>
    %59 = vector.shape_cast %58 : vector<1x64xf32> to vector<64xf32>
    %60 = vector.shape_cast %59 : vector<64xf32> to vector<1x1x64xf32>
    %61 = vector.broadcast %60 : vector<1x1x64xf32> to vector<8x16x64xf32>
    %62 = arith.mulf %57, %61 : vector<8x16x64xf32>
    %63 = arith.addf %56, %62 : vector<8x16x64xf32>
    %64 = vector.extract_strided_slice %8 {offsets = [2, 0, 0], sizes = [8, 16, 64], strides = [1, 1, 1]} : vector<10x16x64xf32> to vector<8x16x64xf32>
    %65 = vector.extract_strided_slice %0 {offsets = [8, 0], sizes = [1, 64], strides = [1, 1]} : vector<9x64xf32> to vector<1x64xf32>
    %66 = vector.shape_cast %65 : vector<1x64xf32> to vector<64xf32>
    %67 = vector.shape_cast %66 : vector<64xf32> to vector<1x1x64xf32>
    %68 = vector.broadcast %67 : vector<1x1x64xf32> to vector<8x16x64xf32>
    %69 = arith.mulf %64, %68 : vector<8x16x64xf32>
    %70 = arith.addf %63, %69 : vector<8x16x64xf32>
    %71 = vector.shape_cast %70 : vector<8x16x64xf32> to vector<128x64xf32>
    %72 = arith.truncf %71 : vector<128x64xf32> to vector<128x64xbf16>
    %cst = arith.constant dense<0.000000e+00> : vector<128x128xf32>
    %73 = tpu.matmul %72, %1, %cst {dimension_numbers = #tpu.dot_dimension_numbers<[1], [0], [0], [1], [0, 0, 1, 1], [], []>} : vector<128x64xbf16>, vector<64x128xbf16>, vector<128x128xf32> -> vector<128x128xf32>
    %74 = vector.broadcast %2 : vector<1x128xf32> to vector<128x128xf32>
    %75 = arith.mulf %73, %74 : vector<128x128xf32>
    %76 = vector.broadcast %3 : vector<1x128xf32> to vector<128x128xf32>
    %77 = arith.addf %75, %76 : vector<128x128xf32>
    %c0_11 = arith.constant 0 : index
    %c0_12 = arith.constant 0 : index
    %c0_13 = arith.constant 0 : index
    %78 = vector.load %arg6[%c0_11, %c0_12, %c0_13] : memref<1x256x128xf32, #tpu.memory_space<vmem>>, vector<1x128x128xf32>
    %79 = vector.shape_cast %78 : vector<1x128x128xf32> to vector<128x128xf32>
    %80 = vector.shape_cast %77 : vector<128x128xf32> to vector<1x128x128xf32>
    tpu.vector_store %arg6[%c0_11, %c0_12, %c0_13], %80 {strides = array<i32>} : memref<1x256x128xf32, #tpu.memory_space<vmem>>, vector<1x128x128xf32>,
    %c0_14 = arith.constant 0 : index
    %c8 = arith.constant 8 : index
    %c0_15 = arith.constant 0 : index
    %c0_16 = arith.constant 0 : index
    %81 = vector.load %arg1[%c0_14, %c8, %c0_15, %c0_16] : memref<1x18x18x64xf32, #tpu.memory_space<vmem>>, vector<1x10x18x64xf32>
    %82 = vector.shape_cast %81 : vector<1x10x18x64xf32> to vector<10x18x64xf32>
    %83 = vector.extract_strided_slice %82 {offsets = [0, 0, 0], sizes = [10, 16, 64], strides = [1, 1, 1]} : vector<10x18x64xf32> to vector<10x16x64xf32>
    %84 = vector.extract_strided_slice %82 {offsets = [0, 1, 0], sizes = [10, 16, 64], strides = [1, 1, 1]} : vector<10x18x64xf32> to vector<10x16x64xf32>
    %85 = vector.extract_strided_slice %82 {offsets = [0, 2, 0], sizes = [10, 16, 64], strides = [1, 1, 1]} : vector<10x18x64xf32> to vector<10x16x64xf32>
    %86 = vector.extract_strided_slice %83 {offsets = [0, 0, 0], sizes = [8, 16, 64], strides = [1, 1, 1]} : vector<10x16x64xf32> to vector<8x16x64xf32>
    %87 = vector.extract_strided_slice %0 {offsets = [0, 0], sizes = [1, 64], strides = [1, 1]} : vector<9x64xf32> to vector<1x64xf32>
    %88 = vector.shape_cast %87 : vector<1x64xf32> to vector<64xf32>
    %89 = vector.shape_cast %88 : vector<64xf32> to vector<1x1x64xf32>
    %90 = vector.broadcast %89 : vector<1x1x64xf32> to vector<8x16x64xf32>
    %91 = arith.mulf %86, %90 : vector<8x16x64xf32>
    %92 = vector.extract_strided_slice %84 {offsets = [0, 0, 0], sizes = [8, 16, 64], strides = [1, 1, 1]} : vector<10x16x64xf32> to vector<8x16x64xf32>
    %93 = vector.extract_strided_slice %0 {offsets = [1, 0], sizes = [1, 64], strides = [1, 1]} : vector<9x64xf32> to vector<1x64xf32>
    %94 = vector.shape_cast %93 : vector<1x64xf32> to vector<64xf32>
    %95 = vector.shape_cast %94 : vector<64xf32> to vector<1x1x64xf32>
    %96 = vector.broadcast %95 : vector<1x1x64xf32> to vector<8x16x64xf32>
    %97 = arith.mulf %92, %96 : vector<8x16x64xf32>
    %98 = arith.addf %91, %97 : vector<8x16x64xf32>
    %99 = vector.extract_strided_slice %85 {offsets = [0, 0, 0], sizes = [8, 16, 64], strides = [1, 1, 1]} : vector<10x16x64xf32> to vector<8x16x64xf32>
    %100 = vector.extract_strided_slice %0 {offsets = [2, 0], sizes = [1, 64], strides = [1, 1]} : vector<9x64xf32> to vector<1x64xf32>
    %101 = vector.shape_cast %100 : vector<1x64xf32> to vector<64xf32>
    %102 = vector.shape_cast %101 : vector<64xf32> to vector<1x1x64xf32>
    %103 = vector.broadcast %102 : vector<1x1x64xf32> to vector<8x16x64xf32>
    %104 = arith.mulf %99, %103 : vector<8x16x64xf32>
    %105 = arith.addf %98, %104 : vector<8x16x64xf32>
    %106 = vector.extract_strided_slice %83 {offsets = [1, 0, 0], sizes = [8, 16, 64], strides = [1, 1, 1]} : vector<10x16x64xf32> to vector<8x16x64xf32>
    %107 = vector.extract_strided_slice %0 {offsets = [3, 0], sizes = [1, 64], strides = [1, 1]} : vector<9x64xf32> to vector<1x64xf32>
    %108 = vector.shape_cast %107 : vector<1x64xf32> to vector<64xf32>
    %109 = vector.shape_cast %108 : vector<64xf32> to vector<1x1x64xf32>
    %110 = vector.broadcast %109 : vector<1x1x64xf32> to vector<8x16x64xf32>
    %111 = arith.mulf %106, %110 : vector<8x16x64xf32>
    %112 = arith.addf %105, %111 : vector<8x16x64xf32>
    %113 = vector.extract_strided_slice %84 {offsets = [1, 0, 0], sizes = [8, 16, 64], strides = [1, 1, 1]} : vector<10x16x64xf32> to vector<8x16x64xf32>
    %114 = vector.extract_strided_slice %0 {offsets = [4, 0], sizes = [1, 64], strides = [1, 1]} : vector<9x64xf32> to vector<1x64xf32>
    %115 = vector.shape_cast %114 : vector<1x64xf32> to vector<64xf32>
    %116 = vector.shape_cast %115 : vector<64xf32> to vector<1x1x64xf32>
    %117 = vector.broadcast %116 : vector<1x1x64xf32> to vector<8x16x64xf32>
    %118 = arith.mulf %113, %117 : vector<8x16x64xf32>
    %119 = arith.addf %112, %118 : vector<8x16x64xf32>
    %120 = vector.extract_strided_slice %85 {offsets = [1, 0, 0], sizes = [8, 16, 64], strides = [1, 1, 1]} : vector<10x16x64xf32> to vector<8x16x64xf32>
    %121 = vector.extract_strided_slice %0 {offsets = [5, 0], sizes = [1, 64], strides = [1, 1]} : vector<9x64xf32> to vector<1x64xf32>
    %122 = vector.shape_cast %121 : vector<1x64xf32> to vector<64xf32>
    %123 = vector.shape_cast %122 : vector<64xf32> to vector<1x1x64xf32>
    %124 = vector.broadcast %123 : vector<1x1x64xf32> to vector<8x16x64xf32>
    %125 = arith.mulf %120, %124 : vector<8x16x64xf32>
    %126 = arith.addf %119, %125 : vector<8x16x64xf32>
    %127 = vector.extract_strided_slice %83 {offsets = [2, 0, 0], sizes = [8, 16, 64], strides = [1, 1, 1]} : vector<10x16x64xf32> to vector<8x16x64xf32>
    %128 = vector.extract_strided_slice %0 {offsets = [6, 0], sizes = [1, 64], strides = [1, 1]} : vector<9x64xf32> to vector<1x64xf32>
    %129 = vector.shape_cast %128 : vector<1x64xf32> to vector<64xf32>
    %130 = vector.shape_cast %129 : vector<64xf32> to vector<1x1x64xf32>
    %131 = vector.broadcast %130 : vector<1x1x64xf32> to vector<8x16x64xf32>
    %132 = arith.mulf %127, %131 : vector<8x16x64xf32>
    %133 = arith.addf %126, %132 : vector<8x16x64xf32>
    %134 = vector.extract_strided_slice %84 {offsets = [2, 0, 0], sizes = [8, 16, 64], strides = [1, 1, 1]} : vector<10x16x64xf32> to vector<8x16x64xf32>
    %135 = vector.extract_strided_slice %0 {offsets = [7, 0], sizes = [1, 64], strides = [1, 1]} : vector<9x64xf32> to vector<1x64xf32>
    %136 = vector.shape_cast %135 : vector<1x64xf32> to vector<64xf32>
    %137 = vector.shape_cast %136 : vector<64xf32> to vector<1x1x64xf32>
    %138 = vector.broadcast %137 : vector<1x1x64xf32> to vector<8x16x64xf32>
    %139 = arith.mulf %134, %138 : vector<8x16x64xf32>
    %140 = arith.addf %133, %139 : vector<8x16x64xf32>
    %141 = vector.extract_strided_slice %85 {offsets = [2, 0, 0], sizes = [8, 16, 64], strides = [1, 1, 1]} : vector<10x16x64xf32> to vector<8x16x64xf32>
    %142 = vector.extract_strided_slice %0 {offsets = [8, 0], sizes = [1, 64], strides = [1, 1]} : vector<9x64xf32> to vector<1x64xf32>
    %143 = vector.shape_cast %142 : vector<1x64xf32> to vector<64xf32>
    %144 = vector.shape_cast %143 : vector<64xf32> to vector<1x1x64xf32>
    %145 = vector.broadcast %144 : vector<1x1x64xf32> to vector<8x16x64xf32>
    %146 = arith.mulf %141, %145 : vector<8x16x64xf32>
    %147 = arith.addf %140, %146 : vector<8x16x64xf32>
    %148 = vector.shape_cast %147 : vector<8x16x64xf32> to vector<128x64xf32>
    %149 = arith.truncf %148 : vector<128x64xf32> to vector<128x64xbf16>
    %cst_17 = arith.constant dense<0.000000e+00> : vector<128x128xf32>
    %150 = tpu.matmul %149, %1, %cst_17 {dimension_numbers = #tpu.dot_dimension_numbers<[1], [0], [0], [1], [0, 0, 1, 1], [], []>} : vector<128x64xbf16>, vector<64x128xbf16>, vector<128x128xf32> -> vector<128x128xf32>
    %151 = vector.broadcast %2 : vector<1x128xf32> to vector<128x128xf32>
    %152 = arith.mulf %150, %151 : vector<128x128xf32>
    %153 = vector.broadcast %3 : vector<1x128xf32> to vector<128x128xf32>
    %154 = arith.addf %152, %153 : vector<128x128xf32>
    %c0_18 = arith.constant 0 : index
    %c128 = arith.constant 128 : index
    %c0_19 = arith.constant 0 : index
    %155 = vector.load %arg6[%c0_18, %c128, %c0_19] : memref<1x256x128xf32, #tpu.memory_space<vmem>>, vector<1x128x128xf32>
    %156 = vector.shape_cast %155 : vector<1x128x128xf32> to vector<128x128xf32>
    %157 = vector.shape_cast %154 : vector<128x128xf32> to vector<1x128x128xf32>
    tpu.vector_store %arg6[%c0_18, %c128, %c0_19], %157 {strides = array<i32>} : memref<1x256x128xf32, #tpu.memory_space<vmem>>, vector<1x128x128xf32>,
    return
  }
  func.func @transform_0(%arg0: i32) -> (i32, i32, i32, i32) {
    %c0_i32 = arith.constant 0 : i32
    %c0_i32_0 = arith.constant 0 : i32
    %c0_i32_1 = arith.constant 0 : i32
    %c0_i32_2 = arith.constant 0 : i32
    return %arg0, %c0_i32, %c0_i32_0, %c0_i32_1 : i32, i32, i32, i32
  }
  func.func @transform_1(%arg0: i32) -> (i32, i32) {
    %c0_i32 = arith.constant 0 : i32
    %c0_i32_0 = arith.constant 0 : i32
    %c0_i32_1 = arith.constant 0 : i32
    return %c0_i32, %c0_i32_0 : i32, i32
  }
  func.func @transform_2(%arg0: i32) -> (i32, i32) {
    %c0_i32 = arith.constant 0 : i32
    %c0_i32_0 = arith.constant 0 : i32
    %c0_i32_1 = arith.constant 0 : i32
    return %c0_i32, %c0_i32_0 : i32, i32
  }
  func.func @transform_3(%arg0: i32) -> (i32, i32) {
    %c0_i32 = arith.constant 0 : i32
    %c0_i32_0 = arith.constant 0 : i32
    %c0_i32_1 = arith.constant 0 : i32
    return %c0_i32, %c0_i32_0 : i32, i32
  }
  func.func @transform_4(%arg0: i32) -> (i32, i32) {
    %c0_i32 = arith.constant 0 : i32
    %c0_i32_0 = arith.constant 0 : i32
    %c0_i32_1 = arith.constant 0 : i32
    return %c0_i32, %c0_i32_0 : i32, i32
  }
  func.func @transform_5(%arg0: i32) -> (i32, i32, i32) {
    %c0_i32 = arith.constant 0 : i32
    %c0_i32_0 = arith.constant 0 : i32
    %c0_i32_1 = arith.constant 0 : i32
    return %arg0, %c0_i32, %c0_i32_0 : i32, i32, i32
  }
}

</mosaic_0001>

<llo_original>
// kernel: separable_conv_block.1
$region0: #{separable_conv_block.1}
  #allocation0 [shape = 'u32[]', space=smem, size = 0x4, offset = 0x4, fixed_abs, tag = 'smem constant byte address 0x4 - core index']
  #allocation1 [shape = 'u32[72,128]{1,0:T(1,128)}', space=vmem, size = 0x9000, scoped, tag = 'internal scratch']
  %s0 = inlined_call_operand.vmem [shape: f32[2,18,18,64], index: 0, kind: input, shape index: {}]
  %s1 = inlined_call_operand.vmem [shape: f32[9,64], index: 1, kind: input, shape index: {}]
  %s2 = inlined_call_operand.vmem [shape: bf16[64,128], index: 2, kind: input, shape index: {}]
  %s3 = inlined_call_operand.vmem [shape: f32[1,128], index: 3, kind: input, shape index: {}]
  %s4 = inlined_call_operand.vmem [shape: f32[1,128], index: 4, kind: input, shape index: {}]
  %s5 = inlined_call_operand.vmem [shape: f32[2,256,128], index: 5, kind: output, shape index: {}]
  %s6 = sld [smem:[#allocation0]]
  $region53: #{separable_conv_block.1} parent=0
    _
  %s8 = ssub.s32 1, %s6
  %s9 = scalar_select 0, %s8, %s6
  loop: start=0, step=1, limit=4
  $region2: #{separable_conv_block.1} parent=0 // loop_pre_header
    _
  $region3: #{separable_conv_block.1} parent=0 // loop_header
    %s11 = sphi 0, %s15
    %p12 = scmp.ge.s32.totalorder %s11, 4
    %s21 = sphi 0, %s23
    %s24 = sphi 0, %s21
    %s25 = sphi 0, %s24
    %s41 = sphi 0, %s25
    %s45 = sphi 0, %s45
    %s47 = sphi 0, %s45
    %s48 = sphi 0, %s47
    %s62 = sphi 0, %s48
    %s66 = sphi 0, %s66
    %s68 = sphi 0, %s66
    %s69 = sphi 0, %s68
    %s83 = sphi 0, %s69
    %s87 = sphi 0, %s87
    %s89 = sphi 0, %s87
    %s90 = sphi 0, %s89
    %s104 = sphi 0, %s90
    %s108 = sphi 0, %s108
    %s110 = sphi 0, %s108
    %s111 = sphi 0, %s110
    %s125 = sphi 0, %s111
    %s131 = sphi 0, %s133
    %s134 = sphi 0, %s131
    %s135 = sphi 0, %s134
    %s151 = sphi 0, %s135
  $region4: #{separable_conv_block.1} parent=0 // loop_header_branch
    %14 = sbr.rel (%p12) target = $region8
  $region5: #{separable_conv_block.1} parent=0 // loop_body
    %s16 = ssub.s32 %s11, 1
    %s17 = ssub.s32 %s11, 2
    %s18 = sadd.s32 %s11, 1
    %s19 = ssub.s32 %s11, %s18
    %p20 = scmp.eq.s32.totalorder %s19, 0
    %s22 = sadd.s32 %s21, 1
    %s23 = scalar_select %p20, %s21, %s22
    %p26 = pneg %p20
    %p27 = scmp.eq.s32.totalorder %s11, 1
    %p28 = por %p26, %p27
    %p29 = scmp.ne.s32.totalorder %s21, %s24
    %p30 = scmp.eq.s32.totalorder %s11, 0
    %p31 = por %p29, %p30
    %p32 = scmp.ne.s32.totalorder %s21, %s24
    %p33 = scmp.eq.s32.totalorder %s16, 1
    %p34 = por %p32, %p33
    %p35 = scmp.ne.s32.totalorder %s24, %s25
    %p36 = scmp.eq.s32.totalorder %s16, 0
    %p37 = por %p35, %p36
    %p38 = scmp.ne.s32.totalorder %s24, %s25
    %p39 = scmp.eq.s32.totalorder %s17, 1
    %p40 = por %p38, %p39
    %p42 = scmp.ne.s32.totalorder %s25, %s41
    %p43 = scmp.eq.s32.totalorder %s17, 0
    %p44 = por %p42, %p43
    %s46 = sadd.s32 %s45, 1
    %p49 = scmp.eq.s32.totalorder %s11, 1
    %p50 = scmp.ne.s32.totalorder %s45, %s47
    %p51 = scmp.eq.s32.totalorder %s11, 0
    %p52 = por %p50, %p51
    %p53 = scmp.ne.s32.totalorder %s45, %s47
    %p54 = scmp.eq.s32.totalorder %s16, 1
    %p55 = por %p53, %p54
    %p56 = scmp.ne.s32.totalorder %s47, %s48
    %p57 = scmp.eq.s32.totalorder %s16, 0
    %p58 = por %p56, %p57
    %p59 = scmp.ne.s32.totalorder %s47, %s48
    %p60 = scmp.eq.s32.totalorder %s17, 1
    %p61 = por %p59, %p60
    %p63 = scmp.ne.s32.totalorder %s48, %s62
    %p64 = scmp.eq.s32.totalorder %s17, 0
    %p65 = por %p63, %p64
    %s67 = sadd.s32 %s66, 1
    %p70 = scmp.eq.s32.totalorder %s11, 1
    %p71 = scmp.ne.s32.totalorder %s66, %s68
    %p72 = scmp.eq.s32.totalorder %s11, 0
    %p73 = por %p71, %p72
    %p74 = scmp.ne.s32.totalorder %s66, %s68
    %p75 = scmp.eq.s32.totalorder %s16, 1
    %p76 = por %p74, %p75
    %p77 = scmp.ne.s32.totalorder %s68, %s69
    %p78 = scmp.eq.s32.totalorder %s16, 0
    %p79 = por %p77, %p78
    %p80 = scmp.ne.s32.totalorder %s68, %s69
    %p81 = scmp.eq.s32.totalorder %s17, 1
    %p82 = por %p80, %p81
    %p84 = scmp.ne.s32.totalorder %s69, %s83
    %p85 = scmp.eq.s32.totalorder %s17, 0
    %p86 = por %p84, %p85
    %s88 = sadd.s32 %s87, 1
    %p91 = scmp.eq.s32.totalorder %s11, 1
    %p92 = scmp.ne.s32.totalorder %s87, %s89
    %p93 = scmp.eq.s32.totalorder %s11, 0
    %p94 = por %p92, %p93
    %p95 = scmp.ne.s32.totalorder %s87, %s89
    %p96 = scmp.eq.s32.totalorder %s16, 1
    %p97 = por %p95, %p96
    %p98 = scmp.ne.s32.totalorder %s89, %s90
    %p99 = scmp.eq.s32.totalorder %s16, 0
    %p100 = por %p98, %p99
    %p101 = scmp.ne.s32.totalorder %s89, %s90
    %p102 = scmp.eq.s32.totalorder %s17, 1
    %p103 = por %p101, %p102
    %p105 = scmp.ne.s32.totalorder %s90, %s104
    %p106 = scmp.eq.s32.totalorder %s17, 0
    %p107 = por %p105, %p106
    %s109 = sadd.s32 %s108, 1
    %p112 = scmp.eq.s32.totalorder %s11, 1
    %p113 = scmp.ne.s32.totalorder %s108, %s110
    %p114 = scmp.eq.s32.totalorder %s11, 0
    %p115 = por %p113, %p114
    %p116 = scmp.ne.s32.totalorder %s108, %s110
    %p117 = scmp.eq.s32.totalorder %s16, 1
    %p118 = por %p116, %p117
    %p119 = scmp.ne.s32.totalorder %s110, %s111
    %p120 = scmp.eq.s32.totalorder %s16, 0
    %p121 = por %p119, %p120
    %p122 = scmp.ne.s32.totalorder %s110, %s111
    %p123 = scmp.eq.s32.totalorder %s17, 1
    %p124 = por %p122, %p123
    %p126 = scmp.ne.s32.totalorder %s111, %s125
    %p127 = scmp.eq.s32.totalorder %s17, 0
    %p128 = por %p126, %p127
    %s129 = ssub.s32 %s11, %s18
    %p130 = scmp.eq.s32.totalorder %s129, 0
    %s132 = sadd.s32 %s131, 1
    %s133 = scalar_select %p130, %s131, %s132
    %p136 = pneg %p130
    %p137 = scmp.eq.s32.totalorder %s11, 1
    %p138 = por %p136, %p137
    %p139 = scmp.ne.s32.totalorder %s131, %s134
    %p140 = scmp.eq.s32.totalorder %s11, 0
    %p141 = por %p139, %p140
    %p142 = scmp.ne.s32.totalorder %s131, %s134
    %p143 = scmp.eq.s32.totalorder %s16, 1
    %p144 = por %p142, %p143
    %p145 = scmp.ne.s32.totalorder %s134, %s135
    %p146 = scmp.eq.s32.totalorder %s16, 0
    %p147 = por %p145, %p146
    %p148 = scmp.ne.s32.totalorder %s134, %s135
    %p149 = scmp.eq.s32.totalorder %s17, 1
    %p150 = por %p148, %p149
    %p152 = scmp.ne.s32.totalorder %s135, %s151
    %p153 = scmp.eq.s32.totalorder %s17, 0
    %p154 = por %p152, %p153
    %p155 = scmp.le.s32.totalorder 1, %s11
    %p156 = scmp.lt.s32.totalorder %s11, 3
    %p157 = pnand %p155, %p156
    %p158 = pneg %p157
    // Predicated region
    $region9: #{separable_conv_block.1} parent=5 // pred_check
      _
    $region10: #{separable_conv_block.1} parent=5 // pred_check_branch
      %160 = sbr.rel (%p157) target = $region12
    $region11: #{separable_conv_block.1} parent=5 // pred_region
      %s161 = ssub.s32 %s11, 1
      // Predicated region
      $region13: #{separable_conv_block.1} parent=11 // pred_check
        %p162 = pneg %p58
      $region14: #{separable_conv_block.1} parent=11 // pred_check_branch
        %164 = sbr.rel (%p162) target = $region16
      $region15: #{separable_conv_block.1} parent=11 // pred_region
        _
      $region16: #{separable_conv_block.1} parent=11 // pred_fallthru
        _
      // Predicated region
      $region17: #{separable_conv_block.1} parent=11 // pred_check
        %p165 = pneg %p79
      $region18: #{separable_conv_block.1} parent=11 // pred_check_branch
        %167 = sbr.rel (%p165) target = $region20
      $region19: #{separable_conv_block.1} parent=11 // pred_region
        _
      $region20: #{separable_conv_block.1} parent=11 // pred_fallthru
        _
      // Predicated region
      $region21: #{separable_conv_block.1} parent=11 // pred_check
        %p168 = pneg %p100
      $region22: #{separable_conv_block.1} parent=11 // pred_check_branch
        %170 = sbr.rel (%p168) target = $region24
      $region23: #{separable_conv_block.1} parent=11 // pred_region
        _
      $region24: #{separable_conv_block.1} parent=11 // pred_fallthru
        _
      // Predicated region
      $region25: #{separable_conv_block.1} parent=11 // pred_check
        %p171 = pneg %p121
      $region26: #{separable_conv_block.1} parent=11 // pred_check_branch
        %173 = sbr.rel (%p171) target = $region28
      $region27: #{separable_conv_block.1} parent=11 // pred_region
        _
      $region28: #{separable_conv_block.1} parent=11 // pred_fallthru
        _
    $region12: #{separable_conv_block.1} parent=5 // pred_fallthru
      _
    %p174 = scmp.lt.s32.totalorder %s11, 2
    // Predicated region
    $region29: #{separable_conv_block.1} parent=5 // pred_check
      %p175 = pneg %p174
    $region30: #{separable_conv_block.1} parent=5 // pred_check_branch
      %177 = sbr.rel (%p175) target = $region32
    $region31: #{separable_conv_block.1} parent=5 // pred_region
      // Predicated region
      $region33: #{separable_conv_block.1} parent=31 // pred_check
        %p178 = pneg %p31
      $region34: #{separable_conv_block.1} parent=31 // pred_check_branch
        %180 = sbr.rel (%p178) target = $region36
      $region35: #{separable_conv_block.1} parent=31 // pred_region
        %p181 = scmp.lt.s32.totalorder %s11, 1
        %s182 = scalar_select %p181, %s11, 1
        %s183 = smul.addr %s182, 54
        %s184 = smul.addr %s183, 8
        %s185 = scalar_lea.vmem %s0, %s184
      $region36: #{separable_conv_block.1} parent=31 // pred_fallthru
        _
    $region32: #{separable_conv_block.1} parent=5 // pred_fallthru
      _
    %p186 = scmp.le.s32.totalorder 1, %s11
    %p187 = scmp.lt.s32.totalorder %s11, 3
    %p188 = pnand %p186, %p187
    %p189 = pneg %p188
    // Predicated region
    $region37: #{separable_conv_block.1} parent=5 // pred_check
      _
    $region38: #{separable_conv_block.1} parent=5 // pred_check_branch
      %191 = sbr.rel (%p188) target = $region40
    $region39: #{separable_conv_block.1} parent=5 // pred_region
      %s192 = ssub.s32 %s11, 1
      %p193 = scmp.lt.s32.totalorder %s16, 1
      %s194 = scalar_select %p193, %s16, 1
      %s195 = smul.addr %s194, 54
      %s196 = smul.addr %s195, 8
      %s197 = scalar_lea.vmem %s0, %s196
      %p198 = pneg %p37
      %p199 = pneg %p34
      %p200 = pneg %p58
      %p201 = pneg %p55
      %p202 = pneg %p79
      %p203 = pneg %p76
      %p204 = pneg %p100
      %p205 = pneg %p97
      %p206 = pneg %p121
      %p207 = pneg %p118
      %p208 = pneg %p147
      %p209 = pneg %p144
      %p210 = scmp.lt.s32.totalorder %s16, 1
      %s211 = scalar_select %p210, %s16, 1
      %s212 = smul.addr %s211, 32
      %s213 = smul.addr %s212, 8
      %s214 = scalar_lea.vmem %s5, %s213
      %p215 = scmp.lt.s32.totalorder %s16, 1
      %s216 = scalar_select %p215, %s16, 1
      %s217 = smul.addr %s216, 54
      %s218 = smul.addr %s217, 8
      %s219 = scalar_lea.vmem %s0, %s218
      %p220 = scmp.lt.s32.totalorder %s16, 1
      %s221 = scalar_select %p220, %s16, 1
      %s222 = smul.addr %s221, 32
      %s223 = smul.addr %s222, 8
      %s224 = scalar_lea.vmem %s5, %s223
      %v226 = vld [vmem:[%s1] sm:$0xff]
      %v227 = vld [vmem:[%s1 + $0x8] sm:$0x1]
      %v228 = vld [vmem:[%s2] sm:$0xf]
      %v229 = vld [vmem:[%s2 + $0x4] sm:$0xf]
      %v230 = vld [vmem:[%s2 + $0x8] sm:$0xf]
      %v231 = vld [vmem:[%s2 + $0xc] sm:$0xf]
      %v232 = vld [vmem:[%s2 + $0x10] sm:$0xf]
      %v233 = vld [vmem:[%s2 + $0x14] sm:$0xf]
      %v234 = vld [vmem:[%s2 + $0x18] sm:$0xf]
      %v235 = vld [vmem:[%s2 + $0x1c] sm:$0xf]
      %v236 = vld [vmem:[%s3] sm:$0x1]
      %v237 = vld [vmem:[%s4] sm:$0x1]
      %v238 = vld [vmem:[%s219] sm:$0xff]
      %v239 = vld [vmem:[%s219 + $0x8] sm:$0xff]
      %v240 = vld [vmem:[%s219 + $0x10] sm:$0x3]
      %v241 = vld [vmem:[%s219 + $0x18] sm:$0xff]
      %v242 = vld [vmem:[%s219 + $0x20] sm:$0xff]
      %v243 = vld [vmem:[%s219 + $0x28] sm:$0x3]
      %v244 = vld [vmem:[%s219 + $0x30] sm:$0xff]
      %v245 = vld [vmem:[%s219 + $0x38] sm:$0xff]
      %v246 = vld [vmem:[%s219 + $0x40] sm:$0x3]
      %v247 = vld [vmem:[%s219 + $0x48] sm:$0xff]
      %v248 = vld [vmem:[%s219 + $0x50] sm:$0xff]
      %v249 = vld [vmem:[%s219 + $0x58] sm:$0x3]
      %v250 = vld [vmem:[%s219 + $0x60] sm:$0xff]
      %v251 = vld [vmem:[%s219 + $0x68] sm:$0xff]
      %v252 = vld [vmem:[%s219 + $0x70] sm:$0x3]
      %v253 = vld [vmem:[%s219 + $0x78] sm:$0xff]
      %v254 = vld [vmem:[%s219 + $0x80] sm:$0xff]
      %v255 = vld [vmem:[%s219 + $0x88] sm:$0x3]
      %v256 = vld [vmem:[%s219 + $0x90] sm:$0xff]
      %v257 = vld [vmem:[%s219 + $0x98] sm:$0xff]
      %v258 = vld [vmem:[%s219 + $0xa0] sm:$0x3]
      %v259 = vld [vmem:[%s219 + $0xa8] sm:$0xff]
      %v260 = vld [vmem:[%s219 + $0xb0] sm:$0xff]
      %v261 = vld [vmem:[%s219 + $0xb8] sm:$0x3]
      %v262 = vld [vmem:[%s219 + $0xc0] sm:$0xff]
      %v263 = vld [vmem:[%s219 + $0xc8] sm:$0xff]
      %v264 = vld [vmem:[%s219 + $0xd0] sm:$0x3]
      %v265 = vld [vmem:[%s219 + $0xd8] sm:$0xff]
      %v266 = vld [vmem:[%s219 + $0xe0] sm:$0xff]
      %v267 = vld [vmem:[%s219 + $0xe8] sm:$0x3]
      %v268 = vperm.slane %v226, 0
      %v269 = vmul.f32 %v238, %v268
      %v270 = vmul.f32 %v239, %v268
      %v271 = vmul.f32 %v241, %v268
      %v272 = vmul.f32 %v242, %v268
      %v273 = vmul.f32 %v244, %v268
      %v274 = vmul.f32 %v245, %v268
      %v275 = vmul.f32 %v247, %v268
      %v276 = vmul.f32 %v248, %v268
      %v277 = vmul.f32 %v250, %v268
      %v278 = vmul.f32 %v251, %v268
      %v279 = vmul.f32 %v253, %v268
      %v280 = vmul.f32 %v254, %v268
      %v281 = vmul.f32 %v256, %v268
      %v282 = vmul.f32 %v257, %v268
      %v283 = vmul.f32 %v259, %v268
      %v284 = vmul.f32 %v260, %v268
      %v285 = vperm.slane %v226, 1
      %v286 = vmul.f32 %v238, %v285
      %v287 = vmul.f32 %v239, %v285
      %v288 = vmul.f32 %v240, %v285
      %v289 = vmul.f32 %v241, %v285
      %v290 = vmul.f32 %v242, %v285
      %v291 = vmul.f32 %v243, %v285
      %v292 = vmul.f32 %v244, %v285
      %v293 = vmul.f32 %v245, %v285
      %v294 = vmul.f32 %v246, %v285
      %v295 = vmul.f32 %v247, %v285
      %v296 = vmul.f32 %v248, %v285
      %v297 = vmul.f32 %v249, %v285
      %v298 = vmul.f32 %v250, %v285
      %v299 = vmul.f32 %v251, %v285
      %v300 = vmul.f32 %v252, %v285
      %v301 = vmul.f32 %v253, %v285
      %v302 = vmul.f32 %v254, %v285
      %v303 = vmul.f32 %v255, %v285
      %v304 = vmul.f32 %v256, %v285
      %v305 = vmul.f32 %v257, %v285
      %v306 = vmul.f32 %v258, %v285
      %v307 = vmul.f32 %v259, %v285
      %v308 = vmul.f32 %v260, %v285
      %v309 = vmul.f32 %v261, %v285
      %vm334 = vcmask 1046528
      %v335 = vrot.slane %v286, 1
      %v336 = vrot.slane %v287, 1
      %v337 = vsel %vm334, %v335, %v336
      %v338 = vrot.slane %v288, 1
      %v339 = vsel %vm334, %v336, %v338
      %v340 = vrot.slane %v289, 1
      %v341 = vrot.slane %v290, 1
      %v342 = vsel %vm334, %v340, %v341
      %v343 = vrot.slane %v291, 1
      %v344 = vsel %vm334, %v341, %v343
      %v345 = vrot.slane %v292, 1
      %v346 = vrot.slane %v293, 1
      %v347 = vsel %vm334, %v345, %v346
      %v348 = vrot.slane %v294, 1
      %v349 = vsel %vm334, %v346, %v348
      %v350 = vrot.slane %v295, 1
      %v351 = vrot.slane %v296, 1
      %v352 = vsel %vm334, %v350, %v351
      %v353 = vrot.slane %v297, 1
      %v354 = vsel %vm334, %v351, %v353
      %v355 = vrot.slane %v298, 1
      %v356 = vrot.slane %v299, 1
      %v357 = vsel %vm334, %v355, %v356
      %v358 = vrot.slane %v300, 1
      %v359 = vsel %vm334, %v356, %v358
      %v360 = vrot.slane %v301, 1
      %v361 = vrot.slane %v302, 1
      %v362 = vsel %vm334, %v360, %v361
      %v363 = vrot.slane %v303, 1
      %v364 = vsel %vm334, %v361, %v363
      %v365 = vrot.slane %v304, 1
      %v366 = vrot.slane %v305, 1
      %v367 = vsel %vm334, %v365, %v366
      %v368 = vrot.slane %v306, 1
      %v369 = vsel %vm334, %v366, %v368
      %v370 = vrot.slane %v307, 1
      %v371 = vrot.slane %v308, 1
      %v372 = vsel %vm334, %v370, %v371
      %v373 = vrot.slane %v309, 1
      %v374 = vsel %vm334, %v371, %v373
      %v391 = vadd.f32 %v269, %v337
      %v392 = vadd.f32 %v270, %v339
      %v393 = vadd.f32 %v271, %v342
      %v394 = vadd.f32 %v272, %v344
      %v395 = vadd.f32 %v273, %v347
      %v396 = vadd.f32 %v274, %v349
      %v397 = vadd.f32 %v275, %v352
      %v398 = vadd.f32 %v276, %v354
      %v399 = vadd.f32 %v277, %v357
      %v400 = vadd.f32 %v278, %v359
      %v401 = vadd.f32 %v279, %v362
      %v402 = vadd.f32 %v280, %v364
      %v403 = vadd.f32 %v281, %v367
      %v404 = vadd.f32 %v282, %v369
      %v405 = vadd.f32 %v283, %v372
      %v406 = vadd.f32 %v284, %v374
      %v407 = vperm.slane %v226, 2
      %v408 = vmul.f32 %v238, %v407
      %v409 = vmul.f32 %v239, %v407
      %v410 = vmul.f32 %v240, %v407
      %v411 = vmul.f32 %v241, %v407
      %v412 = vmul.f32 %v242, %v407
      %v413 = vmul.f32 %v243, %v407
      %v414 = vmul.f32 %v244, %v407
      %v415 = vmul.f32 %v245, %v407
      %v416 = vmul.f32 %v246, %v407
      %v417 = vmul.f32 %v247, %v407
      %v418 = vmul.f32 %v248, %v407
      %v419 = vmul.f32 %v249, %v407
      %v420 = vmul.f32 %v250, %v407
      %v421 = vmul.f32 %v251, %v407
      %v422 = vmul.f32 %v252, %v407
      %v423 = vmul.f32 %v253, %v407
      %v424 = vmul.f32 %v254, %v407
      %v425 = vmul.f32 %v255, %v407
      %v426 = vmul.f32 %v256, %v407
      %v427 = vmul.f32 %v257, %v407
      %v428 = vmul.f32 %v258, %v407
      %v429 = vmul.f32 %v259, %v407
      %v430 = vmul.f32 %v260, %v407
      %v431 = vmul.f32 %v261, %v407
      %vm456 = vcmask 1045504
      %v457 = vrot.slane %v408, 2
      %v458 = vrot.slane %v409, 2
      %v459 = vsel %vm456, %v457, %v458
      %v460 = vrot.slane %v410, 2
      %v461 = vsel %vm456, %v458, %v460
      %v462 = vrot.slane %v411, 2
      %v463 = vrot.slane %v412, 2
      %v464 = vsel %vm456, %v462, %v463
      %v465 = vrot.slane %v413, 2
      %v466 = vsel %vm456, %v463, %v465
      %v467 = vrot.slane %v414, 2
      %v468 = vrot.slane %v415, 2
      %v469 = vsel %vm456, %v467, %v468
      %v470 = vrot.slane %v416, 2
      %v471 = vsel %vm456, %v468, %v470
      %v472 = vrot.slane %v417, 2
      %v473 = vrot.slane %v418, 2
      %v474 = vsel %vm456, %v472, %v473
      %v475 = vrot.slane %v419, 2
      %v476 = vsel %vm456, %v473, %v475
      %v477 = vrot.slane %v420, 2
      %v478 = vrot.slane %v421, 2
      %v479 = vsel %vm456, %v477, %v478
      %v480 = vrot.slane %v422, 2
      %v481 = vsel %vm456, %v478, %v480
      %v482 = vrot.slane %v423, 2
      %v483 = vrot.slane %v424, 2
      %v484 = vsel %vm456, %v482, %v483
      %v485 = vrot.slane %v425, 2
      %v486 = vsel %vm456, %v483, %v485
      %v487 = vrot.slane %v426, 2
      %v488 = vrot.slane %v427, 2
      %v489 = vsel %vm456, %v487, %v488
      %v490 = vrot.slane %v428, 2
      %v491 = vsel %vm456, %v488, %v490
      %v492 = vrot.slane %v429, 2
      %v493 = vrot.slane %v430, 2
      %v494 = vsel %vm456, %v492, %v493
      %v495 = vrot.slane %v431, 2
      %v496 = vsel %vm456, %v493, %v495
      %v513 = vadd.f32 %v391, %v459
      %v514 = vadd.f32 %v392, %v461
      %v515 = vadd.f32 %v393, %v464
      %v516 = vadd.f32 %v394, %v466
      %v517 = vadd.f32 %v395, %v469
      %v518 = vadd.f32 %v396, %v471
      %v519 = vadd.f32 %v397, %v474
      %v520 = vadd.f32 %v398, %v476
      %v521 = vadd.f32 %v399, %v479
      %v522 = vadd.f32 %v400, %v481
      %v523 = vadd.f32 %v401, %v484
      %v524 = vadd.f32 %v402, %v486
      %v525 = vadd.f32 %v403, %v489
      %v526 = vadd.f32 %v404, %v491
      %v527 = vadd.f32 %v405, %v494
      %v528 = vadd.f32 %v406, %v496
      %v529 = vperm.slane %v226, 3
      %v530 = vmul.f32 %v241, %v529
      %v531 = vmul.f32 %v242, %v529
      %v532 = vmul.f32 %v244, %v529
      %v533 = vmul.f32 %v245, %v529
      %v534 = vmul.f32 %v247, %v529
      %v535 = vmul.f32 %v248, %v529
      %v536 = vmul.f32 %v250, %v529
      %v537 = vmul.f32 %v251, %v529
      %v538 = vmul.f32 %v253, %v529
      %v539 = vmul.f32 %v254, %v529
      %v540 = vmul.f32 %v256, %v529
      %v541 = vmul.f32 %v257, %v529
      %v542 = vmul.f32 %v259, %v529
      %v543 = vmul.f32 %v260, %v529
      %v544 = vmul.f32 %v262, %v529
      %v545 = vmul.f32 %v263, %v529
      %v546 = vadd.f32 %v513, %v530
      %v547 = vadd.f32 %v514, %v531
      %v548 = vadd.f32 %v515, %v532
      %v549 = vadd.f32 %v516, %v533
      %v550 = vadd.f32 %v517, %v534
      %v551 = vadd.f32 %v518, %v535
      %v552 = vadd.f32 %v519, %v536
      %v553 = vadd.f32 %v520, %v537
      %v554 = vadd.f32 %v521, %v538
      %v555 = vadd.f32 %v522, %v539
      %v556 = vadd.f32 %v523, %v540
      %v557 = vadd.f32 %v524, %v541
      %v558 = vadd.f32 %v525, %v542
      %v559 = vadd.f32 %v526, %v543
      %v560 = vadd.f32 %v527, %v544
      %v561 = vadd.f32 %v528, %v545
      %v562 = vperm.slane %v226, 4
      %v563 = vmul.f32 %v241, %v562
      %v564 = vmul.f32 %v242, %v562
      %v565 = vmul.f32 %v243, %v562
      %v566 = vmul.f32 %v244, %v562
      %v567 = vmul.f32 %v245, %v562
      %v568 = vmul.f32 %v246, %v562
      %v569 = vmul.f32 %v247, %v562
      %v570 = vmul.f32 %v248, %v562
      %v571 = vmul.f32 %v249, %v562
      %v572 = vmul.f32 %v250, %v562
      %v573 = vmul.f32 %v251, %v562
      %v574 = vmul.f32 %v252, %v562
      %v575 = vmul.f32 %v253, %v562
      %v576 = vmul.f32 %v254, %v562
      %v577 = vmul.f32 %v255, %v562
      %v578 = vmul.f32 %v256, %v562
      %v579 = vmul.f32 %v257, %v562
      %v580 = vmul.f32 %v258, %v562
      %v581 = vmul.f32 %v259, %v562
      %v582 = vmul.f32 %v260, %v562
      %v583 = vmul.f32 %v261, %v562
      %v584 = vmul.f32 %v262, %v562
      %v585 = vmul.f32 %v263, %v562
      %v586 = vmul.f32 %v264, %v562
      %v611 = vrot.slane %v563, 1
      %v612 = vrot.slane %v564, 1
      %v613 = vsel %vm334, %v611, %v612
      %v614 = vrot.slane %v565, 1
      %v615 = vsel %vm334, %v612, %v614
      %v616 = vrot.slane %v566, 1
      %v617 = vrot.slane %v567, 1
      %v618 = vsel %vm334, %v616, %v617
      %v619 = vrot.slane %v568, 1
      %v620 = vsel %vm334, %v617, %v619
      %v621 = vrot.slane %v569, 1
      %v622 = vrot.slane %v570, 1
      %v623 = vsel %vm334, %v621, %v622
      %v624 = vrot.slane %v571, 1
      %v625 = vsel %vm334, %v622, %v624
      %v626 = vrot.slane %v572, 1
      %v627 = vrot.slane %v573, 1
      %v628 = vsel %vm334, %v626, %v627
      %v629 = vrot.slane %v574, 1
      %v630 = vsel %vm334, %v627, %v629
      %v631 = vrot.slane %v575, 1
      %v632 = vrot.slane %v576, 1
      %v633 = vsel %vm334, %v631, %v632
      %v634 = vrot.slane %v577, 1
      %v635 = vsel %vm334, %v632, %v634
      %v636 = vrot.slane %v578, 1
      %v637 = vrot.slane %v579, 1
      %v638 = vsel %vm334, %v636, %v637
      %v639 = vrot.slane %v580, 1
      %v640 = vsel %vm334, %v637, %v639
      %v641 = vrot.slane %v581, 1
      %v642 = vrot.slane %v582, 1
      %v643 = vsel %vm334, %v641, %v642
      %v644 = vrot.slane %v583, 1
      %v645 = vsel %vm334, %v642, %v644
      %v646 = vrot.slane %v584, 1
      %v647 = vrot.slane %v585, 1
      %v648 = vsel %vm334, %v646, %v647
      %v649 = vrot.slane %v586, 1
      %v650 = vsel %vm334, %v647, %v649
      %v667 = vadd.f32 %v546, %v613
      %v668 = vadd.f32 %v547, %v615
      %v669 = vadd.f32 %v548, %v618
      %v670 = vadd.f32 %v549, %v620
      %v671 = vadd.f32 %v550, %v623
      %v672 = vadd.f32 %v551, %v625
      %v673 = vadd.f32 %v552, %v628
      %v674 = vadd.f32 %v553, %v630
      %v675 = vadd.f32 %v554, %v633
      %v676 = vadd.f32 %v555, %v635
      %v677 = vadd.f32 %v556, %v638
      %v678 = vadd.f32 %v557, %v640
      %v679 = vadd.f32 %v558, %v643
      %v680 = vadd.f32 %v559, %v645
      %v681 = vadd.f32 %v560, %v648
      %v682 = vadd.f32 %v561, %v650
      %v683 = vperm.slane %v226, 5
      %v684 = vmul.f32 %v241, %v683
      %v685 = vmul.f32 %v242, %v683
      %v686 = vmul.f32 %v243, %v683
      %v687 = vmul.f32 %v244, %v683
      %v688 = vmul.f32 %v245, %v683
      %v689 = vmul.f32 %v246, %v683
      %v690 = vmul.f32 %v247, %v683
      %v691 = vmul.f32 %v248, %v683
      %v692 = vmul.f32 %v249, %v683
      %v693 = vmul.f32 %v250, %v683
      %v694 = vmul.f32 %v251, %v683
      %v695 = vmul.f32 %v252, %v683
      %v696 = vmul.f32 %v253, %v683
      %v697 = vmul.f32 %v254, %v683
      %v698 = vmul.f32 %v255, %v683
      %v699 = vmul.f32 %v256, %v683
      %v700 = vmul.f32 %v257, %v683
      %v701 = vmul.f32 %v258, %v683
      %v702 = vmul.f32 %v259, %v683
      %v703 = vmul.f32 %v260, %v683
      %v704 = vmul.f32 %v261, %v683
      %v705 = vmul.f32 %v262, %v683
      %v706 = vmul.f32 %v263, %v683
      %v707 = vmul.f32 %v264, %v683
      %v732 = vrot.slane %v684, 2
      %v733 = vrot.slane %v685, 2
      %v734 = vsel %vm456, %v732, %v733
      %v735 = vrot.slane %v686, 2
      %v736 = vsel %vm456, %v733, %v735
      %v737 = vrot.slane %v687, 2
      %v738 = vrot.slane %v688, 2
      %v739 = vsel %vm456, %v737, %v738
      %v740 = vrot.slane %v689, 2
      %v741 = vsel %vm456, %v738, %v740
      %v742 = vrot.slane %v690, 2
      %v743 = vrot.slane %v691, 2
      %v744 = vsel %vm456, %v742, %v743
      %v745 = vrot.slane %v692, 2
      %v746 = vsel %vm456, %v743, %v745
      %v747 = vrot.slane %v693, 2
      %v748 = vrot.slane %v694, 2
      %v749 = vsel %vm456, %v747, %v748
      %v750 = vrot.slane %v695, 2
      %v751 = vsel %vm456, %v748, %v750
      %v752 = vrot.slane %v696, 2
      %v753 = vrot.slane %v697, 2
      %v754 = vsel %vm456, %v752, %v753
      %v755 = vrot.slane %v698, 2
      %v756 = vsel %vm456, %v753, %v755
      %v757 = vrot.slane %v699, 2
      %v758 = vrot.slane %v700, 2
      %v759 = vsel %vm456, %v757, %v758
      %v760 = vrot.slane %v701, 2
      %v761 = vsel %vm456, %v758, %v760
      %v762 = vrot.slane %v702, 2
      %v763 = vrot.slane %v703, 2
      %v764 = vsel %vm456, %v762, %v763
      %v765 = vrot.slane %v704, 2
      %v766 = vsel %vm456, %v763, %v765
      %v767 = vrot.slane %v705, 2
      %v768 = vrot.slane %v706, 2
      %v769 = vsel %vm456, %v767, %v768
      %v770 = vrot.slane %v707, 2
      %v771 = vsel %vm456, %v768, %v770
      %v788 = vadd.f32 %v667, %v734
      %v789 = vadd.f32 %v668, %v736
      %v790 = vadd.f32 %v669, %v739
      %v791 = vadd.f32 %v670, %v741
      %v792 = vadd.f32 %v671, %v744
      %v793 = vadd.f32 %v672, %v746
      %v794 = vadd.f32 %v673, %v749
      %v795 = vadd.f32 %v674, %v751
      %v796 = vadd.f32 %v675, %v754
      %v797 = vadd.f32 %v676, %v756
      %v798 = vadd.f32 %v677, %v759
      %v799 = vadd.f32 %v678, %v761
      %v800 = vadd.f32 %v679, %v764
      %v801 = vadd.f32 %v680, %v766
      %v802 = vadd.f32 %v681, %v769
      %v803 = vadd.f32 %v682, %v771
      %v804 = vperm.slane %v226, 6
      %v805 = vmul.f32 %v244, %v804
      %v806 = vmul.f32 %v245, %v804
      %v807 = vmul.f32 %v247, %v804
      %v808 = vmul.f32 %v248, %v804
      %v809 = vmul.f32 %v250, %v804
      %v810 = vmul.f32 %v251, %v804
      %v811 = vmul.f32 %v253, %v804
      %v812 = vmul.f32 %v254, %v804
      %v813 = vmul.f32 %v256, %v804
      %v814 = vmul.f32 %v257, %v804
      %v815 = vmul.f32 %v259, %v804
      %v816 = vmul.f32 %v260, %v804
      %v817 = vmul.f32 %v262, %v804
      %v818 = vmul.f32 %v263, %v804
      %v819 = vmul.f32 %v265, %v804
      %v820 = vmul.f32 %v266, %v804
      %v821 = vadd.f32 %v788, %v805
      %v822 = vadd.f32 %v789, %v806
      %v823 = vadd.f32 %v790, %v807
      %v824 = vadd.f32 %v791, %v808
      %v825 = vadd.f32 %v792, %v809
      %v826 = vadd.f32 %v793, %v810
      %v827 = vadd.f32 %v794, %v811
      %v828 = vadd.f32 %v795, %v812
      %v829 = vadd.f32 %v796, %v813
      %v830 = vadd.f32 %v797, %v814
      %v831 = vadd.f32 %v798, %v815
      %v832 = vadd.f32 %v799, %v816
      %v833 = vadd.f32 %v800, %v817
      %v834 = vadd.f32 %v801, %v818
      %v835 = vadd.f32 %v802, %v819
      %v836 = vadd.f32 %v803, %v820
      %v837 = vperm.slane %v226, 7
      %v838 = vmul.f32 %v244, %v837
      %v839 = vmul.f32 %v245, %v837
      %v840 = vmul.f32 %v246, %v837
      %v841 = vmul.f32 %v247, %v837
      %v842 = vmul.f32 %v248, %v837
      %v843 = vmul.f32 %v249, %v837
      %v844 = vmul.f32 %v250, %v837
      %v845 = vmul.f32 %v251, %v837
      %v846 = vmul.f32 %v252, %v837
      %v847 = vmul.f32 %v253, %v837
      %v848 = vmul.f32 %v254, %v837
      %v849 = vmul.f32 %v255, %v837
      %v850 = vmul.f32 %v256, %v837
      %v851 = vmul.f32 %v257, %v837
      %v852 = vmul.f32 %v258, %v837
      %v853 = vmul.f32 %v259, %v837
      %v854 = vmul.f32 %v260, %v837
      %v855 = vmul.f32 %v261, %v837
      %v856 = vmul.f32 %v262, %v837
      %v857 = vmul.f32 %v263, %v837
      %v858 = vmul.f32 %v264, %v837
      %v859 = vmul.f32 %v265, %v837
      %v860 = vmul.f32 %v266, %v837
      %v861 = vmul.f32 %v267, %v837
      %v886 = vrot.slane %v838, 1
      %v887 = vrot.slane %v839, 1
      %v888 = vsel %vm334, %v886, %v887
      %v889 = vrot.slane %v840, 1
      %v890 = vsel %vm334, %v887, %v889
      %v891 = vrot.slane %v841, 1
      %v892 = vrot.slane %v842, 1
      %v893 = vsel %vm334, %v891, %v892
      %v894 = vrot.slane %v843, 1
      %v895 = vsel %vm334, %v892, %v894
      %v896 = vrot.slane %v844, 1
      %v897 = vrot.slane %v845, 1
      %v898 = vsel %vm334, %v896, %v897
      %v899 = vrot.slane %v846, 1
      %v900 = vsel %vm334, %v897, %v899
      %v901 = vrot.slane %v847, 1
      %v902 = vrot.slane %v848, 1
      %v903 = vsel %vm334, %v901, %v902
      %v904 = vrot.slane %v849, 1
      %v905 = vsel %vm334, %v902, %v904
      %v906 = vrot.slane %v850, 1
      %v907 = vrot.slane %v851, 1
      %v908 = vsel %vm334, %v906, %v907
      %v909 = vrot.slane %v852, 1
      %v910 = vsel %vm334, %v907, %v909
      %v911 = vrot.slane %v853, 1
      %v912 = vrot.slane %v854, 1
      %v913 = vsel %vm334, %v911, %v912
      %v914 = vrot.slane %v855, 1
      %v915 = vsel %vm334, %v912, %v914
      %v916 = vrot.slane %v856, 1
      %v917 = vrot.slane %v857, 1
      %v918 = vsel %vm334, %v916, %v917
      %v919 = vrot.slane %v858, 1
      %v920 = vsel %vm334, %v917, %v919
      %v921 = vrot.slane %v859, 1
      %v922 = vrot.slane %v860, 1
      %v923 = vsel %vm334, %v921, %v922
      %v924 = vrot.slane %v861, 1
      %v925 = vsel %vm334, %v922, %v924
      %v942 = vadd.f32 %v821, %v888
      %v943 = vadd.f32 %v822, %v890
      %v944 = vadd.f32 %v823, %v893
      %v945 = vadd.f32 %v824, %v895
      %v946 = vadd.f32 %v825, %v898
      %v947 = vadd.f32 %v826, %v900
      %v948 = vadd.f32 %v827, %v903
      %v949 = vadd.f32 %v828, %v905
      %v950 = vadd.f32 %v829, %v908
      %v951 = vadd.f32 %v830, %v910
      %v952 = vadd.f32 %v831, %v913
      %v953 = vadd.f32 %v832, %v915
      %v954 = vadd.f32 %v833, %v918
      %v955 = vadd.f32 %v834, %v920
      %v956 = vadd.f32 %v835, %v923
      %v957 = vadd.f32 %v836, %v925
      %v958 = vperm.slane %v227, 0
      %v959 = vmul.f32 %v244, %v958
      %v960 = vmul.f32 %v245, %v958
      %v961 = vmul.f32 %v246, %v958
      %v962 = vmul.f32 %v247, %v958
      %v963 = vmul.f32 %v248, %v958
      %v964 = vmul.f32 %v249, %v958
      %v965 = vmul.f32 %v250, %v958
      %v966 = vmul.f32 %v251, %v958
      %v967 = vmul.f32 %v252, %v958
      %v968 = vmul.f32 %v253, %v958
      %v969 = vmul.f32 %v254, %v958
      %v970 = vmul.f32 %v255, %v958
      %v971 = vmul.f32 %v256, %v958
      %v972 = vmul.f32 %v257, %v958
      %v973 = vmul.f32 %v258, %v958
      %v974 = vmul.f32 %v259, %v958
      %v975 = vmul.f32 %v260, %v958
      %v976 = vmul.f32 %v261, %v958
      %v977 = vmul.f32 %v262, %v958
      %v978 = vmul.f32 %v263, %v958
      %v979 = vmul.f32 %v264, %v958
      %v980 = vmul.f32 %v265, %v958
      %v981 = vmul.f32 %v266, %v958
      %v982 = vmul.f32 %v267, %v958
      %v1007 = vrot.slane %v959, 2
      %v1008 = vrot.slane %v960, 2
      %v1009 = vsel %vm456, %v1007, %v1008
      %v1010 = vrot.slane %v961, 2
      %v1011 = vsel %vm456, %v1008, %v1010
      %v1012 = vrot.slane %v962, 2
      %v1013 = vrot.slane %v963, 2
      %v1014 = vsel %vm456, %v1012, %v1013
      %v1015 = vrot.slane %v964, 2
      %v1016 = vsel %vm456, %v1013, %v1015
      %v1017 = vrot.slane %v965, 2
      %v1018 = vrot.slane %v966, 2
      %v1019 = vsel %vm456, %v1017, %v1018
      %v1020 = vrot.slane %v967, 2
      %v1021 = vsel %vm456, %v1018, %v1020
      %v1022 = vrot.slane %v968, 2
      %v1023 = vrot.slane %v969, 2
      %v1024 = vsel %vm456, %v1022, %v1023
      %v1025 = vrot.slane %v970, 2
      %v1026 = vsel %vm456, %v1023, %v1025
      %v1027 = vrot.slane %v971, 2
      %v1028 = vrot.slane %v972, 2
      %v1029 = vsel %vm456, %v1027, %v1028
      %v1030 = vrot.slane %v973, 2
      %v1031 = vsel %vm456, %v1028, %v1030
      %v1032 = vrot.slane %v974, 2
      %v1033 = vrot.slane %v975, 2
      %v1034 = vsel %vm456, %v1032, %v1033
      %v1035 = vrot.slane %v976, 2
      %v1036 = vsel %vm456, %v1033, %v1035
      %v1037 = vrot.slane %v977, 2
      %v1038 = vrot.slane %v978, 2
      %v1039 = vsel %vm456, %v1037, %v1038
      %v1040 = vrot.slane %v979, 2
      %v1041 = vsel %vm456, %v1038, %v1040
      %v1042 = vrot.slane %v980, 2
      %v1043 = vrot.slane %v981, 2
      %v1044 = vsel %vm456, %v1042, %v1043
      %v1045 = vrot.slane %v982, 2
      %v1046 = vsel %vm456, %v1043, %v1045
      %v1063 = vadd.f32 %v942, %v1009
      %v1064 = vadd.f32 %v943, %v1011
      %v1065 = vadd.f32 %v944, %v1014
      %v1066 = vadd.f32 %v945, %v1016
      %v1067 = vadd.f32 %v946, %v1019
      %v1068 = vadd.f32 %v947, %v1021
      %v1069 = vadd.f32 %v948, %v1024
      %v1070 = vadd.f32 %v949, %v1026
      %v1071 = vadd.f32 %v950, %v1029
      %v1072 = vadd.f32 %v951, %v1031
      %v1073 = vadd.f32 %v952, %v1034
      %v1074 = vadd.f32 %v953, %v1036
      %v1075 = vadd.f32 %v954, %v1039
      %v1076 = vadd.f32 %v955, %v1041
      %v1077 = vadd.f32 %v956, %v1044
      %v1078 = vadd.f32 %v957, %v1046
      %v1079 = vpack.c.bf16 %v1064, %v1063
      %v1080 = vpack.c.bf16 %v1066, %v1065
      %v1081 = vpack.c.bf16 %v1068, %v1067
      %v1082 = vpack.c.bf16 %v1070, %v1069
      %v1083 = vpack.c.bf16 %v1072, %v1071
      %v1084 = vpack.c.bf16 %v1074, %v1073
      %v1085 = vpack.c.bf16 %v1076, %v1075
      %v1086 = vpack.c.bf16 %v1078, %v1077
      %v1095 = vunpack.c.l.b16 %v228
      %v1096 = vunpack.c.l.b16 %v229
      %v1097 = vunpack.c.l.b16 %v230
      %v1098 = vunpack.c.l.b16 %v231
      %v1099 = vunpack.c.l.b16 %v232
      %v1100 = vunpack.c.l.b16 %v233
      %v1101 = vunpack.c.l.b16 %v234
      %v1102 = vunpack.c.l.b16 %v235
      %v1103 = vpack.c.b16 %v1096, %v1095
      %v1104 = vpack.c.b16 %v1098, %v1097
      %v1105 = vpack.c.b16 %v1100, %v1099
      %v1106 = vpack.c.b16 %v1102, %v1101
      %vm1111 = vcmask 523264
      %v1113 = vsel %vm1111, %v1079, 0
      %v1116 = vsel %vm1111, %v1080, 0
      %v1119 = vsel %vm1111, %v1081, 0
      %v1122 = vsel %vm1111, %v1082, 0
      %v1125 = vsel %vm1111, %v1083, 0
      %v1128 = vsel %vm1111, %v1084, 0
      %v1131 = vsel %vm1111, %v1085, 0
      %v1134 = vsel %vm1111, %v1086, 0
      %1136 = vmatpush.bf16.msra.mxu0 0
      %1137 = vmatpush.bf16.msra.mxu0 0
      %1138 = vmatpush.bf16.msra.mxu0 0
      %1139 = vmatpush.bf16.msra.mxu0 0
      %1140 = vmatpush.bf16.msra.mxu0 %v1106
      %1141 = vmatpush.bf16.msra.mxu0 %v1105
      %1142 = vmatpush.bf16.msra.mxu0 %v1104
      %1143 = vmatpush.bf16.msra.mxu0 %v1103
      %1144 = vmatmul.bf16.gmra.mxu0 %v1113
      %v1145 = vpop.f32.mrf.mxu0
      %v1146 = vadd.f32 0.0, %v1145
      %v1147 = vpop.f32.mrf.mxu0
      %v1148 = vadd.f32 0.0, %v1147
      %1149 = vmatmul.bf16.gmra.mxu0 %v1116
      %v1150 = vpop.f32.mrf.mxu0
      %v1151 = vadd.f32 0.0, %v1150
      %v1152 = vpop.f32.mrf.mxu0
      %v1153 = vadd.f32 0.0, %v1152
      %1154 = vmatmul.bf16.gmra.mxu0 %v1119
      %v1155 = vpop.f32.mrf.mxu0
      %v1156 = vadd.f32 0.0, %v1155
      %v1157 = vpop.f32.mrf.mxu0
      %v1158 = vadd.f32 0.0, %v1157
      %1159 = vmatmul.bf16.gmra.mxu0 %v1122
      %v1160 = vpop.f32.mrf.mxu0
      %v1161 = vadd.f32 0.0, %v1160
      %v1162 = vpop.f32.mrf.mxu0
      %v1163 = vadd.f32 0.0, %v1162
      %1164 = vmatmul.bf16.gmra.mxu0 %v1125
      %v1165 = vpop.f32.mrf.mxu0
      %v1166 = vadd.f32 0.0, %v1165
      %v1167 = vpop.f32.mrf.mxu0
      %v1168 = vadd.f32 0.0, %v1167
      %1169 = vmatmul.bf16.gmra.mxu0 %v1128
      %v1170 = vpop.f32.mrf.mxu0
      %v1171 = vadd.f32 0.0, %v1170
      %v1172 = vpop.f32.mrf.mxu0
      %v1173 = vadd.f32 0.0, %v1172
      %1174 = vmatmul.bf16.gmra.mxu0 %v1131
      %v1175 = vpop.f32.mrf.mxu0
      %v1176 = vadd.f32 0.0, %v1175
      %v1177 = vpop.f32.mrf.mxu0
      %v1178 = vadd.f32 0.0, %v1177
      %1179 = vmatmul.bf16.gmra.mxu0 %v1134
      %v1180 = vpop.f32.mrf.mxu0
      %v1181 = vadd.f32 0.0, %v1180
      %v1182 = vpop.f32.mrf.mxu0
      %v1183 = vadd.f32 0.0, %v1182
      %1184 = vdwg.mxu0
      %v1186 = vperm.slane %v236, 0
      %v1188 = vmul.f32 %v1146, %v1186
      %v1189 = vmul.f32 %v1148, %v1186
      %v1190 = vmul.f32 %v1151, %v1186
      %v1191 = vmul.f32 %v1153, %v1186
      %v1192 = vmul.f32 %v1156, %v1186
      %v1193 = vmul.f32 %v1158, %v1186
      %v1194 = vmul.f32 %v1161, %v1186
      %v1195 = vmul.f32 %v1163, %v1186
      %v1196 = vmul.f32 %v1166, %v1186
      %v1197 = vmul.f32 %v1168, %v1186
      %v1198 = vmul.f32 %v1171, %v1186
      %v1199 = vmul.f32 %v1173, %v1186
      %v1200 = vmul.f32 %v1176, %v1186
      %v1201 = vmul.f32 %v1178, %v1186
      %v1202 = vmul.f32 %v1181, %v1186
      %v1203 = vmul.f32 %v1183, %v1186
      %v1205 = vperm.slane %v237, 0
      %v1207 = vadd.f32 %v1188, %v1205
      %v1208 = vadd.f32 %v1189, %v1205
      %v1209 = vadd.f32 %v1190, %v1205
      %v1210 = vadd.f32 %v1191, %v1205
      %v1211 = vadd.f32 %v1192, %v1205
      %v1212 = vadd.f32 %v1193, %v1205
      %v1213 = vadd.f32 %v1194, %v1205
      %v1214 = vadd.f32 %v1195, %v1205
      %v1215 = vadd.f32 %v1196, %v1205
      %v1216 = vadd.f32 %v1197, %v1205
      %v1217 = vadd.f32 %v1198, %v1205
      %v1218 = vadd.f32 %v1199, %v1205
      %v1219 = vadd.f32 %v1200, %v1205
      %v1220 = vadd.f32 %v1201, %v1205
      %v1221 = vadd.f32 %v1202, %v1205
      %v1222 = vadd.f32 %v1203, %v1205
      %1223 = vst [vmem:[%s224] sm:$0xff] %v1207
      %1224 = vst [vmem:[%s224 + $0x8] sm:$0xff] %v1208
      %1225 = vst [vmem:[%s224 + $0x10] sm:$0xff] %v1209
      %1226 = vst [vmem:[%s224 + $0x18] sm:$0xff] %v1210
      %1227 = vst [vmem:[%s224 + $0x20] sm:$0xff] %v1211
      %1228 = vst [vmem:[%s224 + $0x28] sm:$0xff] %v1212
      %1229 = vst [vmem:[%s224 + $0x30] sm:$0xff] %v1213
      %1230 = vst [vmem:[%s224 + $0x38] sm:$0xff] %v1214
      %1231 = vst [vmem:[%s224 + $0x40] sm:$0xff] %v1215
      %1232 = vst [vmem:[%s224 + $0x48] sm:$0xff] %v1216
      %1233 = vst [vmem:[%s224 + $0x50] sm:$0xff] %v1217
      %1234 = vst [vmem:[%s224 + $0x58] sm:$0xff] %v1218
      %1235 = vst [vmem:[%s224 + $0x60] sm:$0xff] %v1219
      %1236 = vst [vmem:[%s224 + $0x68] sm:$0xff] %v1220
      %1237 = vst [vmem:[%s224 + $0x70] sm:$0xff] %v1221
      %1238 = vst [vmem:[%s224 + $0x78] sm:$0xff] %v1222
      %s1239 = scalar_lea.vmem %s219, 192
      %v1240 = vld [vmem:[%s1239] sm:$0xff]
      %v1241 = vld [vmem:[%s1239 + $0x8] sm:$0xff]
      %v1242 = vld [vmem:[%s1239 + $0x10] sm:$0x3]
      %v1243 = vld [vmem:[%s1239 + $0x18] sm:$0xff]
      %v1244 = vld [vmem:[%s1239 + $0x20] sm:$0xff]
      %v1245 = vld [vmem:[%s1239 + $0x28] sm:$0x3]
      %v1246 = vld [vmem:[%s1239 + $0x30] sm:$0xff]
      %v1247 = vld [vmem:[%s1239 + $0x38] sm:$0xff]
      %v1248 = vld [vmem:[%s1239 + $0x40] sm:$0x3]
      %v1249 = vld [vmem:[%s1239 + $0x48] sm:$0xff]
      %v1250 = vld [vmem:[%s1239 + $0x50] sm:$0xff]
      %v1251 = vld [vmem:[%s1239 + $0x58] sm:$0x3]
      %v1252 = vld [vmem:[%s1239 + $0x60] sm:$0xff]
      %v1253 = vld [vmem:[%s1239 + $0x68] sm:$0xff]
      %v1254 = vld [vmem:[%s1239 + $0x70] sm:$0x3]
      %v1255 = vld [vmem:[%s1239 + $0x78] sm:$0xff]
      %v1256 = vld [vmem:[%s1239 + $0x80] sm:$0xff]
      %v1257 = vld [vmem:[%s1239 + $0x88] sm:$0x3]
      %v1258 = vld [vmem:[%s1239 + $0x90] sm:$0xff]
      %v1259 = vld [vmem:[%s1239 + $0x98] sm:$0xff]
      %v1260 = vld [vmem:[%s1239 + $0xa0] sm:$0x3]
      %v1261 = vld [vmem:[%s1239 + $0xa8] sm:$0xff]
      %v1262 = vld [vmem:[%s1239 + $0xb0] sm:$0xff]
      %v1263 = vld [vmem:[%s1239 + $0xb8] sm:$0x3]
      %v1264 = vld [vmem:[%s1239 + $0xc0] sm:$0xff]
      %v1265 = vld [vmem:[%s1239 + $0xc8] sm:$0xff]
      %v1266 = vld [vmem:[%s1239 + $0xd0] sm:$0x3]
      %v1267 = vld [vmem:[%s1239 + $0xd8] sm:$0xff]
      %v1268 = vld [vmem:[%s1239 + $0xe0] sm:$0xff]
      %v1269 = vld [vmem:[%s1239 + $0xe8] sm:$0x3]
      %v1270 = vmul.f32 %v1240, %v268
      %v1271 = vmul.f32 %v1241, %v268
      %v1272 = vmul.f32 %v1243, %v268
      %v1273 = vmul.f32 %v1244, %v268
      %v1274 = vmul.f32 %v1246, %v268
      %v1275 = vmul.f32 %v1247, %v268
      %v1276 = vmul.f32 %v1249, %v268
      %v1277 = vmul.f32 %v1250, %v268
      %v1278 = vmul.f32 %v1252, %v268
      %v1279 = vmul.f32 %v1253, %v268
      %v1280 = vmul.f32 %v1255, %v268
      %v1281 = vmul.f32 %v1256, %v268
      %v1282 = vmul.f32 %v1258, %v268
      %v1283 = vmul.f32 %v1259, %v268
      %v1284 = vmul.f32 %v1261, %v268
      %v1285 = vmul.f32 %v1262, %v268
      %v1286 = vmul.f32 %v1240, %v285
      %v1287 = vmul.f32 %v1241, %v285
      %v1288 = vmul.f32 %v1242, %v285
      %v1289 = vmul.f32 %v1243, %v285
      %v1290 = vmul.f32 %v1244, %v285
      %v1291 = vmul.f32 %v1245, %v285
      %v1292 = vmul.f32 %v1246, %v285
      %v1293 = vmul.f32 %v1247, %v285
      %v1294 = vmul.f32 %v1248, %v285
      %v1295 = vmul.f32 %v1249, %v285
      %v1296 = vmul.f32 %v1250, %v285
      %v1297 = vmul.f32 %v1251, %v285
      %v1298 = vmul.f32 %v1252, %v285
      %v1299 = vmul.f32 %v1253, %v285
      %v1300 = vmul.f32 %v1254, %v285
      %v1301 = vmul.f32 %v1255, %v285
      %v1302 = vmul.f32 %v1256, %v285
      %v1303 = vmul.f32 %v1257, %v285
      %v1304 = vmul.f32 %v1258, %v285
      %v1305 = vmul.f32 %v1259, %v285
      %v1306 = vmul.f32 %v1260, %v285
      %v1307 = vmul.f32 %v1261, %v285
      %v1308 = vmul.f32 %v1262, %v285
      %v1309 = vmul.f32 %v1263, %v285
      %v1334 = vrot.slane %v1286, 1
      %v1335 = vrot.slane %v1287, 1
      %v1336 = vsel %vm334, %v1334, %v1335
      %v1337 = vrot.slane %v1288, 1
      %v1338 = vsel %vm334, %v1335, %v1337
      %v1339 = vrot.slane %v1289, 1
      %v1340 = vrot.slane %v1290, 1
      %v1341 = vsel %vm334, %v1339, %v1340
      %v1342 = vrot.slane %v1291, 1
      %v1343 = vsel %vm334, %v1340, %v1342
      %v1344 = vrot.slane %v1292, 1
      %v1345 = vrot.slane %v1293, 1
      %v1346 = vsel %vm334, %v1344, %v1345
      %v1347 = vrot.slane %v1294, 1
      %v1348 = vsel %vm334, %v1345, %v1347
      %v1349 = vrot.slane %v1295, 1
      %v1350 = vrot.slane %v1296, 1
      %v1351 = vsel %vm334, %v1349, %v1350
      %v1352 = vrot.slane %v1297, 1
      %v1353 = vsel %vm334, %v1350, %v1352
      %v1354 = vrot.slane %v1298, 1
      %v1355 = vrot.slane %v1299, 1
      %v1356 = vsel %vm334, %v1354, %v1355
      %v1357 = vrot.slane %v1300, 1
      %v1358 = vsel %vm334, %v1355, %v1357
      %v1359 = vrot.slane %v1301, 1
      %v1360 = vrot.slane %v1302, 1
      %v1361 = vsel %vm334, %v1359, %v1360
      %v1362 = vrot.slane %v1303, 1
      %v1363 = vsel %vm334, %v1360, %v1362
      %v1364 = vrot.slane %v1304, 1
      %v1365 = vrot.slane %v1305, 1
      %v1366 = vsel %vm334, %v1364, %v1365
      %v1367 = vrot.slane %v1306, 1
      %v1368 = vsel %vm334, %v1365, %v1367
      %v1369 = vrot.slane %v1307, 1
      %v1370 = vrot.slane %v1308, 1
      %v1371 = vsel %vm334, %v1369, %v1370
      %v1372 = vrot.slane %v1309, 1
      %v1373 = vsel %vm334, %v1370, %v1372
      %v1390 = vadd.f32 %v1270, %v1336
      %v1391 = vadd.f32 %v1271, %v1338
      %v1392 = vadd.f32 %v1272, %v1341
      %v1393 = vadd.f32 %v1273, %v1343
      %v1394 = vadd.f32 %v1274, %v1346
      %v1395 = vadd.f32 %v1275, %v1348
      %v1396 = vadd.f32 %v1276, %v1351
      %v1397 = vadd.f32 %v1277, %v1353
      %v1398 = vadd.f32 %v1278, %v1356
      %v1399 = vadd.f32 %v1279, %v1358
      %v1400 = vadd.f32 %v1280, %v1361
      %v1401 = vadd.f32 %v1281, %v1363
      %v1402 = vadd.f32 %v1282, %v1366
      %v1403 = vadd.f32 %v1283, %v1368
      %v1404 = vadd.f32 %v1284, %v1371
      %v1405 = vadd.f32 %v1285, %v1373
      %v1406 = vmul.f32 %v1240, %v407
      %v1407 = vmul.f32 %v1241, %v407
      %v1408 = vmul.f32 %v1242, %v407
      %v1409 = vmul.f32 %v1243, %v407
      %v1410 = vmul.f32 %v1244, %v407
      %v1411 = vmul.f32 %v1245, %v407
      %v1412 = vmul.f32 %v1246, %v407
      %v1413 = vmul.f32 %v1247, %v407
      %v1414 = vmul.f32 %v1248, %v407
      %v1415 = vmul.f32 %v1249, %v407
      %v1416 = vmul.f32 %v1250, %v407
      %v1417 = vmul.f32 %v1251, %v407
      %v1418 = vmul.f32 %v1252, %v407
      %v1419 = vmul.f32 %v1253, %v407
      %v1420 = vmul.f32 %v1254, %v407
      %v1421 = vmul.f32 %v1255, %v407
      %v1422 = vmul.f32 %v1256, %v407
      %v1423 = vmul.f32 %v1257, %v407
      %v1424 = vmul.f32 %v1258, %v407
      %v1425 = vmul.f32 %v1259, %v407
      %v1426 = vmul.f32 %v1260, %v407
      %v1427 = vmul.f32 %v1261, %v407
      %v1428 = vmul.f32 %v1262, %v407
      %v1429 = vmul.f32 %v1263, %v407
      %v1454 = vrot.slane %v1406, 2
      %v1455 = vrot.slane %v1407, 2
      %v1456 = vsel %vm456, %v1454, %v1455
      %v1457 = vrot.slane %v1408, 2
      %v1458 = vsel %vm456, %v1455, %v1457
      %v1459 = vrot.slane %v1409, 2
      %v1460 = vrot.slane %v1410, 2
      %v1461 = vsel %vm456, %v1459, %v1460
      %v1462 = vrot.slane %v1411, 2
      %v1463 = vsel %vm456, %v1460, %v1462
      %v1464 = vrot.slane %v1412, 2
      %v1465 = vrot.slane %v1413, 2
      %v1466 = vsel %vm456, %v1464, %v1465
      %v1467 = vrot.slane %v1414, 2
      %v1468 = vsel %vm456, %v1465, %v1467
      %v1469 = vrot.slane %v1415, 2
      %v1470 = vrot.slane %v1416, 2
      %v1471 = vsel %vm456, %v1469, %v1470
      %v1472 = vrot.slane %v1417, 2
      %v1473 = vsel %vm456, %v1470, %v1472
      %v1474 = vrot.slane %v1418, 2
      %v1475 = vrot.slane %v1419, 2
      %v1476 = vsel %vm456, %v1474, %v1475
      %v1477 = vrot.slane %v1420, 2
      %v1478 = vsel %vm456, %v1475, %v1477
      %v1479 = vrot.slane %v1421, 2
      %v1480 = vrot.slane %v1422, 2
      %v1481 = vsel %vm456, %v1479, %v1480
      %v1482 = vrot.slane %v1423, 2
      %v1483 = vsel %vm456, %v1480, %v1482
      %v1484 = vrot.slane %v1424, 2
      %v1485 = vrot.slane %v1425, 2
      %v1486 = vsel %vm456, %v1484, %v1485
      %v1487 = vrot.slane %v1426, 2
      %v1488 = vsel %vm456, %v1485, %v1487
      %v1489 = vrot.slane %v1427, 2
      %v1490 = vrot.slane %v1428, 2
      %v1491 = vsel %vm456, %v1489, %v1490
      %v1492 = vrot.slane %v1429, 2
      %v1493 = vsel %vm456, %v1490, %v1492
      %v1510 = vadd.f32 %v1390, %v1456
      %v1511 = vadd.f32 %v1391, %v1458
      %v1512 = vadd.f32 %v1392, %v1461
      %v1513 = vadd.f32 %v1393, %v1463
      %v1514 = vadd.f32 %v1394, %v1466
      %v1515 = vadd.f32 %v1395, %v1468
      %v1516 = vadd.f32 %v1396, %v1471
      %v1517 = vadd.f32 %v1397, %v1473
      %v1518 = vadd.f32 %v1398, %v1476
      %v1519 = vadd.f32 %v1399, %v1478
      %v1520 = vadd.f32 %v1400, %v1481
      %v1521 = vadd.f32 %v1401, %v1483
      %v1522 = vadd.f32 %v1402, %v1486
      %v1523 = vadd.f32 %v1403, %v1488
      %v1524 = vadd.f32 %v1404, %v1491
      %v1525 = vadd.f32 %v1405, %v1493
      %v1526 = vmul.f32 %v1243, %v529
      %v1527 = vmul.f32 %v1244, %v529
      %v1528 = vmul.f32 %v1246, %v529
      %v1529 = vmul.f32 %v1247, %v529
      %v1530 = vmul.f32 %v1249, %v529
      %v1531 = vmul.f32 %v1250, %v529
      %v1532 = vmul.f32 %v1252, %v529
      %v1533 = vmul.f32 %v1253, %v529
      %v1534 = vmul.f32 %v1255, %v529
      %v1535 = vmul.f32 %v1256, %v529
      %v1536 = vmul.f32 %v1258, %v529
      %v1537 = vmul.f32 %v1259, %v529
      %v1538 = vmul.f32 %v1261, %v529
      %v1539 = vmul.f32 %v1262, %v529
      %v1540 = vmul.f32 %v1264, %v529
      %v1541 = vmul.f32 %v1265, %v529
      %v1542 = vadd.f32 %v1510, %v1526
      %v1543 = vadd.f32 %v1511, %v1527
      %v1544 = vadd.f32 %v1512, %v1528
      %v1545 = vadd.f32 %v1513, %v1529
      %v1546 = vadd.f32 %v1514, %v1530
      %v1547 = vadd.f32 %v1515, %v1531
      %v1548 = vadd.f32 %v1516, %v1532
      %v1549 = vadd.f32 %v1517, %v1533
      %v1550 = vadd.f32 %v1518, %v1534
      %v1551 = vadd.f32 %v1519, %v1535
      %v1552 = vadd.f32 %v1520, %v1536
      %v1553 = vadd.f32 %v1521, %v1537
      %v1554 = vadd.f32 %v1522, %v1538
      %v1555 = vadd.f32 %v1523, %v1539
      %v1556 = vadd.f32 %v1524, %v1540
      %v1557 = vadd.f32 %v1525, %v1541
      %v1558 = vmul.f32 %v1243, %v562
      %v1559 = vmul.f32 %v1244, %v562
      %v1560 = vmul.f32 %v1245, %v562
      %v1561 = vmul.f32 %v1246, %v562
      %v1562 = vmul.f32 %v1247, %v562
      %v1563 = vmul.f32 %v1248, %v562
      %v1564 = vmul.f32 %v1249, %v562
      %v1565 = vmul.f32 %v1250, %v562
      %v1566 = vmul.f32 %v1251, %v562
      %v1567 = vmul.f32 %v1252, %v562
      %v1568 = vmul.f32 %v1253, %v562
      %v1569 = vmul.f32 %v1254, %v562
      %v1570 = vmul.f32 %v1255, %v562
      %v1571 = vmul.f32 %v1256, %v562
      %v1572 = vmul.f32 %v1257, %v562
      %v1573 = vmul.f32 %v1258, %v562
      %v1574 = vmul.f32 %v1259, %v562
      %v1575 = vmul.f32 %v1260, %v562
      %v1576 = vmul.f32 %v1261, %v562
      %v1577 = vmul.f32 %v1262, %v562
      %v1578 = vmul.f32 %v1263, %v562
      %v1579 = vmul.f32 %v1264, %v562
      %v1580 = vmul.f32 %v1265, %v562
      %v1581 = vmul.f32 %v1266, %v562
      %v1606 = vrot.slane %v1558, 1
      %v1607 = vrot.slane %v1559, 1
      %v1608 = vsel %vm334, %v1606, %v1607
      %v1609 = vrot.slane %v1560, 1
      %v1610 = vsel %vm334, %v1607, %v1609
      %v1611 = vrot.slane %v1561, 1
      %v1612 = vrot.slane %v1562, 1
      %v1613 = vsel %vm334, %v1611, %v1612
      %v1614 = vrot.slane %v1563, 1
      %v1615 = vsel %vm334, %v1612, %v1614
      %v1616 = vrot.slane %v1564, 1
      %v1617 = vrot.slane %v1565, 1
      %v1618 = vsel %vm334, %v1616, %v1617
      %v1619 = vrot.slane %v1566, 1
      %v1620 = vsel %vm334, %v1617, %v1619
      %v1621 = vrot.slane %v1567, 1
      %v1622 = vrot.slane %v1568, 1
      %v1623 = vsel %vm334, %v1621, %v1622
      %v1624 = vrot.slane %v1569, 1
      %v1625 = vsel %vm334, %v1622, %v1624
      %v1626 = vrot.slane %v1570, 1
      %v1627 = vrot.slane %v1571, 1
      %v1628 = vsel %vm334, %v1626, %v1627
      %v1629 = vrot.slane %v1572, 1
      %v1630 = vsel %vm334, %v1627, %v1629
      %v1631 = vrot.slane %v1573, 1
      %v1632 = vrot.slane %v1574, 1
      %v1633 = vsel %vm334, %v1631, %v1632
      %v1634 = vrot.slane %v1575, 1
      %v1635 = vsel %vm334, %v1632, %v1634
      %v1636 = vrot.slane %v1576, 1
      %v1637 = vrot.slane %v1577, 1
      %v1638 = vsel %vm334, %v1636, %v1637
      %v1639 = vrot.slane %v1578, 1
      %v1640 = vsel %vm334, %v1637, %v1639
      %v1641 = vrot.slane %v1579, 1
      %v1642 = vrot.slane %v1580, 1
      %v1643 = vsel %vm334, %v1641, %v1642
      %v1644 = vrot.slane %v1581, 1
      %v1645 = vsel %vm334, %v1642, %v1644
      %v1662 = vadd.f32 %v1542, %v1608
      %v1663 = vadd.f32 %v1543, %v1610
      %v1664 = vadd.f32 %v1544, %v1613
      %v1665 = vadd.f32 %v1545, %v1615
      %v1666 = vadd.f32 %v1546, %v1618
      %v1667 = vadd.f32 %v1547, %v1620
      %v1668 = vadd.f32 %v1548, %v1623
      %v1669 = vadd.f32 %v1549, %v1625
      %v1670 = vadd.f32 %v1550, %v1628
      %v1671 = vadd.f32 %v1551, %v1630
      %v1672 = vadd.f32 %v1552, %v1633
      %v1673 = vadd.f32 %v1553, %v1635
      %v1674 = vadd.f32 %v1554, %v1638
      %v1675 = vadd.f32 %v1555, %v1640
      %v1676 = vadd.f32 %v1556, %v1643
      %v1677 = vadd.f32 %v1557, %v1645
      %v1678 = vmul.f32 %v1243, %v683
      %v1679 = vmul.f32 %v1244, %v683
      %v1680 = vmul.f32 %v1245, %v683
      %v1681 = vmul.f32 %v1246, %v683
      %v1682 = vmul.f32 %v1247, %v683
      %v1683 = vmul.f32 %v1248, %v683
      %v1684 = vmul.f32 %v1249, %v683
      %v1685 = vmul.f32 %v1250, %v683
      %v1686 = vmul.f32 %v1251, %v683
      %v1687 = vmul.f32 %v1252, %v683
      %v1688 = vmul.f32 %v1253, %v683
      %v1689 = vmul.f32 %v1254, %v683
      %v1690 = vmul.f32 %v1255, %v683
      %v1691 = vmul.f32 %v1256, %v683
      %v1692 = vmul.f32 %v1257, %v683
      %v1693 = vmul.f32 %v1258, %v683
      %v1694 = vmul.f32 %v1259, %v683
      %v1695 = vmul.f32 %v1260, %v683
      %v1696 = vmul.f32 %v1261, %v683
      %v1697 = vmul.f32 %v1262, %v683
      %v1698 = vmul.f32 %v1263, %v683
      %v1699 = vmul.f32 %v1264, %v683
      %v1700 = vmul.f32 %v1265, %v683
      %v1701 = vmul.f32 %v1266, %v683
      %v1726 = vrot.slane %v1678, 2
      %v1727 = vrot.slane %v1679, 2
      %v1728 = vsel %vm456, %v1726, %v1727
      %v1729 = vrot.slane %v1680, 2
      %v1730 = vsel %vm456, %v1727, %v1729
      %v1731 = vrot.slane %v1681, 2
      %v1732 = vrot.slane %v1682, 2
      %v1733 = vsel %vm456, %v1731, %v1732
      %v1734 = vrot.slane %v1683, 2
      %v1735 = vsel %vm456, %v1732, %v1734
      %v1736 = vrot.slane %v1684, 2
      %v1737 = vrot.slane %v1685, 2
      %v1738 = vsel %vm456, %v1736, %v1737
      %v1739 = vrot.slane %v1686, 2
      %v1740 = vsel %vm456, %v1737, %v1739
      %v1741 = vrot.slane %v1687, 2
      %v1742 = vrot.slane %v1688, 2
      %v1743 = vsel %vm456, %v1741, %v1742
      %v1744 = vrot.slane %v1689, 2
      %v1745 = vsel %vm456, %v1742, %v1744
      %v1746 = vrot.slane %v1690, 2
      %v1747 = vrot.slane %v1691, 2
      %v1748 = vsel %vm456, %v1746, %v1747
      %v1749 = vrot.slane %v1692, 2
      %v1750 = vsel %vm456, %v1747, %v1749
      %v1751 = vrot.slane %v1693, 2
      %v1752 = vrot.slane %v1694, 2
      %v1753 = vsel %vm456, %v1751, %v1752
      %v1754 = vrot.slane %v1695, 2
      %v1755 = vsel %vm456, %v1752, %v1754
      %v1756 = vrot.slane %v1696, 2
      %v1757 = vrot.slane %v1697, 2
      %v1758 = vsel %vm456, %v1756, %v1757
      %v1759 = vrot.slane %v1698, 2
      %v1760 = vsel %vm456, %v1757, %v1759
      %v1761 = vrot.slane %v1699, 2
      %v1762 = vrot.slane %v1700, 2
      %v1763 = vsel %vm456, %v1761, %v1762
      %v1764 = vrot.slane %v1701, 2
      %v1765 = vsel %vm456, %v1762, %v1764
      %v1782 = vadd.f32 %v1662, %v1728
      %v1783 = vadd.f32 %v1663, %v1730
      %v1784 = vadd.f32 %v1664, %v1733
      %v1785 = vadd.f32 %v1665, %v1735
      %v1786 = vadd.f32 %v1666, %v1738
      %v1787 = vadd.f32 %v1667, %v1740
      %v1788 = vadd.f32 %v1668, %v1743
      %v1789 = vadd.f32 %v1669, %v1745
      %v1790 = vadd.f32 %v1670, %v1748
      %v1791 = vadd.f32 %v1671, %v1750
      %v1792 = vadd.f32 %v1672, %v1753
      %v1793 = vadd.f32 %v1673, %v1755
      %v1794 = vadd.f32 %v1674, %v1758
      %v1795 = vadd.f32 %v1675, %v1760
      %v1796 = vadd.f32 %v1676, %v1763
      %v1797 = vadd.f32 %v1677, %v1765
      %v1798 = vmul.f32 %v1246, %v804
      %v1799 = vmul.f32 %v1247, %v804
      %v1800 = vmul.f32 %v1249, %v804
      %v1801 = vmul.f32 %v1250, %v804
      %v1802 = vmul.f32 %v1252, %v804
      %v1803 = vmul.f32 %v1253, %v804
      %v1804 = vmul.f32 %v1255, %v804
      %v1805 = vmul.f32 %v1256, %v804
      %v1806 = vmul.f32 %v1258, %v804
      %v1807 = vmul.f32 %v1259, %v804
      %v1808 = vmul.f32 %v1261, %v804
      %v1809 = vmul.f32 %v1262, %v804
      %v1810 = vmul.f32 %v1264, %v804
      %v1811 = vmul.f32 %v1265, %v804
      %v1812 = vmul.f32 %v1267, %v804
      %v1813 = vmul.f32 %v1268, %v804
      %v1814 = vadd.f32 %v1782, %v1798
      %v1815 = vadd.f32 %v1783, %v1799
      %v1816 = vadd.f32 %v1784, %v1800
      %v1817 = vadd.f32 %v1785, %v1801
      %v1818 = vadd.f32 %v1786, %v1802
      %v1819 = vadd.f32 %v1787, %v1803
      %v1820 = vadd.f32 %v1788, %v1804
      %v1821 = vadd.f32 %v1789, %v1805
      %v1822 = vadd.f32 %v1790, %v1806
      %v1823 = vadd.f32 %v1791, %v1807
      %v1824 = vadd.f32 %v1792, %v1808
      %v1825 = vadd.f32 %v1793, %v1809
      %v1826 = vadd.f32 %v1794, %v1810
      %v1827 = vadd.f32 %v1795, %v1811
      %v1828 = vadd.f32 %v1796, %v1812
      %v1829 = vadd.f32 %v1797, %v1813
      %v1830 = vmul.f32 %v1246, %v837
      %v1831 = vmul.f32 %v1247, %v837
      %v1832 = vmul.f32 %v1248, %v837
      %v1833 = vmul.f32 %v1249, %v837
      %v1834 = vmul.f32 %v1250, %v837
      %v1835 = vmul.f32 %v1251, %v837
      %v1836 = vmul.f32 %v1252, %v837
      %v1837 = vmul.f32 %v1253, %v837
      %v1838 = vmul.f32 %v1254, %v837
      %v1839 = vmul.f32 %v1255, %v837
      %v1840 = vmul.f32 %v1256, %v837
      %v1841 = vmul.f32 %v1257, %v837
      %v1842 = vmul.f32 %v1258, %v837
      %v1843 = vmul.f32 %v1259, %v837
      %v1844 = vmul.f32 %v1260, %v837
      %v1845 = vmul.f32 %v1261, %v837
      %v1846 = vmul.f32 %v1262, %v837
      %v1847 = vmul.f32 %v1263, %v837
      %v1848 = vmul.f32 %v1264, %v837
      %v1849 = vmul.f32 %v1265, %v837
      %v1850 = vmul.f32 %v1266, %v837
      %v1851 = vmul.f32 %v1267, %v837
      %v1852 = vmul.f32 %v1268, %v837
      %v1853 = vmul.f32 %v1269, %v837
      %v1878 = vrot.slane %v1830, 1
      %v1879 = vrot.slane %v1831, 1
      %v1880 = vsel %vm334, %v1878, %v1879
      %v1881 = vrot.slane %v1832, 1
      %v1882 = vsel %vm334, %v1879, %v1881
      %v1883 = vrot.slane %v1833, 1
      %v1884 = vrot.slane %v1834, 1
      %v1885 = vsel %vm334, %v1883, %v1884
      %v1886 = vrot.slane %v1835, 1
      %v1887 = vsel %vm334, %v1884, %v1886
      %v1888 = vrot.slane %v1836, 1
      %v1889 = vrot.slane %v1837, 1
      %v1890 = vsel %vm334, %v1888, %v1889
      %v1891 = vrot.slane %v1838, 1
      %v1892 = vsel %vm334, %v1889, %v1891
      %v1893 = vrot.slane %v1839, 1
      %v1894 = vrot.slane %v1840, 1
      %v1895 = vsel %vm334, %v1893, %v1894
      %v1896 = vrot.slane %v1841, 1
      %v1897 = vsel %vm334, %v1894, %v1896
      %v1898 = vrot.slane %v1842, 1
      %v1899 = vrot.slane %v1843, 1
      %v1900 = vsel %vm334, %v1898, %v1899
      %v1901 = vrot.slane %v1844, 1
      %v1902 = vsel %vm334, %v1899, %v1901
      %v1903 = vrot.slane %v1845, 1
      %v1904 = vrot.slane %v1846, 1
      %v1905 = vsel %vm334, %v1903, %v1904
      %v1906 = vrot.slane %v1847, 1
      %v1907 = vsel %vm334, %v1904, %v1906
      %v1908 = vrot.slane %v1848, 1
      %v1909 = vrot.slane %v1849, 1
      %v1910 = vsel %vm334, %v1908, %v1909
      %v1911 = vrot.slane %v1850, 1
      %v1912 = vsel %vm334, %v1909, %v1911
      %v1913 = vrot.slane %v1851, 1
      %v1914 = vrot.slane %v1852, 1
      %v1915 = vsel %vm334, %v1913, %v1914
      %v1916 = vrot.slane %v1853, 1
      %v1917 = vsel %vm334, %v1914, %v1916
      %v1934 = vadd.f32 %v1814, %v1880
      %v1935 = vadd.f32 %v1815, %v1882
      %v1936 = vadd.f32 %v1816, %v1885
      %v1937 = vadd.f32 %v1817, %v1887
      %v1938 = vadd.f32 %v1818, %v1890
      %v1939 = vadd.f32 %v1819, %v1892
      %v1940 = vadd.f32 %v1820, %v1895
      %v1941 = vadd.f32 %v1821, %v1897
      %v1942 = vadd.f32 %v1822, %v1900
      %v1943 = vadd.f32 %v1823, %v1902
      %v1944 = vadd.f32 %v1824, %v1905
      %v1945 = vadd.f32 %v1825, %v1907
      %v1946 = vadd.f32 %v1826, %v1910
      %v1947 = vadd.f32 %v1827, %v1912
      %v1948 = vadd.f32 %v1828, %v1915
      %v1949 = vadd.f32 %v1829, %v1917
      %v1950 = vmul.f32 %v1246, %v958
      %v1951 = vmul.f32 %v1247, %v958
      %v1952 = vmul.f32 %v1248, %v958
      %v1953 = vmul.f32 %v1249, %v958
      %v1954 = vmul.f32 %v1250, %v958
      %v1955 = vmul.f32 %v1251, %v958
      %v1956 = vmul.f32 %v1252, %v958
      %v1957 = vmul.f32 %v1253, %v958
      %v1958 = vmul.f32 %v1254, %v958
      %v1959 = vmul.f32 %v1255, %v958
      %v1960 = vmul.f32 %v1256, %v958
      %v1961 = vmul.f32 %v1257, %v958
      %v1962 = vmul.f32 %v1258, %v958
      %v1963 = vmul.f32 %v1259, %v958
      %v1964 = vmul.f32 %v1260, %v958
      %v1965 = vmul.f32 %v1261, %v958
      %v1966 = vmul.f32 %v1262, %v958
      %v1967 = vmul.f32 %v1263, %v958
      %v1968 = vmul.f32 %v1264, %v958
      %v1969 = vmul.f32 %v1265, %v958
      %v1970 = vmul.f32 %v1266, %v958
      %v1971 = vmul.f32 %v1267, %v958
      %v1972 = vmul.f32 %v1268, %v958
      %v1973 = vmul.f32 %v1269, %v958
      %v1998 = vrot.slane %v1950, 2
      %v1999 = vrot.slane %v1951, 2
      %v2000 = vsel %vm456, %v1998, %v1999
      %v2001 = vrot.slane %v1952, 2
      %v2002 = vsel %vm456, %v1999, %v2001
      %v2003 = vrot.slane %v1953, 2
      %v2004 = vrot.slane %v1954, 2
      %v2005 = vsel %vm456, %v2003, %v2004
      %v2006 = vrot.slane %v1955, 2
      %v2007 = vsel %vm456, %v2004, %v2006
      %v2008 = vrot.slane %v1956, 2
      %v2009 = vrot.slane %v1957, 2
      %v2010 = vsel %vm456, %v2008, %v2009
      %v2011 = vrot.slane %v1958, 2
      %v2012 = vsel %vm456, %v2009, %v2011
      %v2013 = vrot.slane %v1959, 2
      %v2014 = vrot.slane %v1960, 2
      %v2015 = vsel %vm456, %v2013, %v2014
      %v2016 = vrot.slane %v1961, 2
      %v2017 = vsel %vm456, %v2014, %v2016
      %v2018 = vrot.slane %v1962, 2
      %v2019 = vrot.slane %v1963, 2
      %v2020 = vsel %vm456, %v2018, %v2019
      %v2021 = vrot.slane %v1964, 2
      %v2022 = vsel %vm456, %v2019, %v2021
      %v2023 = vrot.slane %v1965, 2
      %v2024 = vrot.slane %v1966, 2
      %v2025 = vsel %vm456, %v2023, %v2024
      %v2026 = vrot.slane %v1967, 2
      %v2027 = vsel %vm456, %v2024, %v2026
      %v2028 = vrot.slane %v1968, 2
      %v2029 = vrot.slane %v1969, 2
      %v2030 = vsel %vm456, %v2028, %v2029
      %v2031 = vrot.slane %v1970, 2
      %v2032 = vsel %vm456, %v2029, %v2031
      %v2033 = vrot.slane %v1971, 2
      %v2034 = vrot.slane %v1972, 2
      %v2035 = vsel %vm456, %v2033, %v2034
      %v2036 = vrot.slane %v1973, 2
      %v2037 = vsel %vm456, %v2034, %v2036
      %v2054 = vadd.f32 %v1934, %v2000
      %v2055 = vadd.f32 %v1935, %v2002
      %v2056 = vadd.f32 %v1936, %v2005
      %v2057 = vadd.f32 %v1937, %v2007
      %v2058 = vadd.f32 %v1938, %v2010
      %v2059 = vadd.f32 %v1939, %v2012
      %v2060 = vadd.f32 %v1940, %v2015
      %v2061 = vadd.f32 %v1941, %v2017
      %v2062 = vadd.f32 %v1942, %v2020
      %v2063 = vadd.f32 %v1943, %v2022
      %v2064 = vadd.f32 %v1944, %v2025
      %v2065 = vadd.f32 %v1945, %v2027
      %v2066 = vadd.f32 %v1946, %v2030
      %v2067 = vadd.f32 %v1947, %v2032
      %v2068 = vadd.f32 %v1948, %v2035
      %v2069 = vadd.f32 %v1949, %v2037
      %v2070 = vpack.c.bf16 %v2055, %v2054
      %v2071 = vpack.c.bf16 %v2057, %v2056
      %v2072 = vpack.c.bf16 %v2059, %v2058
      %v2073 = vpack.c.bf16 %v2061, %v2060
      %v2074 = vpack.c.bf16 %v2063, %v2062
      %v2075 = vpack.c.bf16 %v2065, %v2064
      %v2076 = vpack.c.bf16 %v2067, %v2066
      %v2077 = vpack.c.bf16 %v2069, %v2068
      %v2079 = vsel %vm1111, %v2070, 0
      %v2082 = vsel %vm1111, %v2071, 0
      %v2085 = vsel %vm1111, %v2072, 0
      %v2088 = vsel %vm1111, %v2073, 0
      %v2091 = vsel %vm1111, %v2074, 0
      %v2094 = vsel %vm1111, %v2075, 0
      %v2097 = vsel %vm1111, %v2076, 0
      %v2100 = vsel %vm1111, %v2077, 0
      %2102 = vmatpush.bf16.msra.mxu0 0
      %2103 = vmatpush.bf16.msra.mxu0 0
      %2104 = vmatpush.bf16.msra.mxu0 0
      %2105 = vmatpush.bf16.msra.mxu0 0
      %2106 = vmatpush.bf16.msra.mxu0 %v1106
      %2107 = vmatpush.bf16.msra.mxu0 %v1105
      %2108 = vmatpush.bf16.msra.mxu0 %v1104
      %2109 = vmatpush.bf16.msra.mxu0 %v1103
      %2110 = vmatmul.bf16.gmra.mxu0 %v2079
      %v2111 = vpop.f32.mrf.mxu0
      %v2112 = vadd.f32 0.0, %v2111
      %v2113 = vpop.f32.mrf.mxu0
      %v2114 = vadd.f32 0.0, %v2113
      %2115 = vmatmul.bf16.gmra.mxu0 %v2082
      %v2116 = vpop.f32.mrf.mxu0
      %v2117 = vadd.f32 0.0, %v2116
      %v2118 = vpop.f32.mrf.mxu0
      %v2119 = vadd.f32 0.0, %v2118
      %2120 = vmatmul.bf16.gmra.mxu0 %v2085
      %v2121 = vpop.f32.mrf.mxu0
      %v2122 = vadd.f32 0.0, %v2121
      %v2123 = vpop.f32.mrf.mxu0
      %v2124 = vadd.f32 0.0, %v2123
      %2125 = vmatmul.bf16.gmra.mxu0 %v2088
      %v2126 = vpop.f32.mrf.mxu0
      %v2127 = vadd.f32 0.0, %v2126
      %v2128 = vpop.f32.mrf.mxu0
      %v2129 = vadd.f32 0.0, %v2128
      %2130 = vmatmul.bf16.gmra.mxu0 %v2091
      %v2131 = vpop.f32.mrf.mxu0
      %v2132 = vadd.f32 0.0, %v2131
      %v2133 = vpop.f32.mrf.mxu0
      %v2134 = vadd.f32 0.0, %v2133
      %2135 = vmatmul.bf16.gmra.mxu0 %v2094
      %v2136 = vpop.f32.mrf.mxu0
      %v2137 = vadd.f32 0.0, %v2136
      %v2138 = vpop.f32.mrf.mxu0
      %v2139 = vadd.f32 0.0, %v2138
      %2140 = vmatmul.bf16.gmra.mxu0 %v2097
      %v2141 = vpop.f32.mrf.mxu0
      %v2142 = vadd.f32 0.0, %v2141
      %v2143 = vpop.f32.mrf.mxu0
      %v2144 = vadd.f32 0.0, %v2143
      %2145 = vmatmul.bf16.gmra.mxu0 %v2100
      %v2146 = vpop.f32.mrf.mxu0
      %v2147 = vadd.f32 0.0, %v2146
      %v2148 = vpop.f32.mrf.mxu0
      %v2149 = vadd.f32 0.0, %v2148
      %2150 = vdwg.mxu0
      %v2151 = vmul.f32 %v2112, %v1186
      %v2152 = vmul.f32 %v2114, %v1186
      %v2153 = vmul.f32 %v2117, %v1186
      %v2154 = vmul.f32 %v2119, %v1186
      %v2155 = vmul.f32 %v2122, %v1186
      %v2156 = vmul.f32 %v2124, %v1186
      %v2157 = vmul.f32 %v2127, %v1186
      %v2158 = vmul.f32 %v2129, %v1186
      %v2159 = vmul.f32 %v2132, %v1186
      %v2160 = vmul.f32 %v2134, %v1186
      %v2161 = vmul.f32 %v2137, %v1186
      %v2162 = vmul.f32 %v2139, %v1186
      %v2163 = vmul.f32 %v2142, %v1186
      %v2164 = vmul.f32 %v2144, %v1186
      %v2165 = vmul.f32 %v2147, %v1186
      %v2166 = vmul.f32 %v2149, %v1186
      %v2167 = vadd.f32 %v2151, %v1205
      %v2168 = vadd.f32 %v2152, %v1205
      %v2169 = vadd.f32 %v2153, %v1205
      %v2170 = vadd.f32 %v2154, %v1205
      %v2171 = vadd.f32 %v2155, %v1205
      %v2172 = vadd.f32 %v2156, %v1205
      %v2173 = vadd.f32 %v2157, %v1205
      %v2174 = vadd.f32 %v2158, %v1205
      %v2175 = vadd.f32 %v2159, %v1205
      %v2176 = vadd.f32 %v2160, %v1205
      %v2177 = vadd.f32 %v2161, %v1205
      %v2178 = vadd.f32 %v2162, %v1205
      %v2179 = vadd.f32 %v2163, %v1205
      %v2180 = vadd.f32 %v2164, %v1205
      %v2181 = vadd.f32 %v2165, %v1205
      %v2182 = vadd.f32 %v2166, %v1205
      %2183 = vst [vmem:[%s224 + $0x80] sm:$0xff] %v2167
      %2184 = vst [vmem:[%s224 + $0x88] sm:$0xff] %v2168
      %2185 = vst [vmem:[%s224 + $0x90] sm:$0xff] %v2169
      %2186 = vst [vmem:[%s224 + $0x98] sm:$0xff] %v2170
      %2187 = vst [vmem:[%s224 + $0xa0] sm:$0xff] %v2171
      %2188 = vst [vmem:[%s224 + $0xa8] sm:$0xff] %v2172
      %2189 = vst [vmem:[%s224 + $0xb0] sm:$0xff] %v2173
      %2190 = vst [vmem:[%s224 + $0xb8] sm:$0xff] %v2174
      %2191 = vst [vmem:[%s224 + $0xc0] sm:$0xff] %v2175
      %2192 = vst [vmem:[%s224 + $0xc8] sm:$0xff] %v2176
      %2193 = vst [vmem:[%s224 + $0xd0] sm:$0xff] %v2177
      %2194 = vst [vmem:[%s224 + $0xd8] sm:$0xff] %v2178
      %2195 = vst [vmem:[%s224 + $0xe0] sm:$0xff] %v2179
      %2196 = vst [vmem:[%s224 + $0xe8] sm:$0xff] %v2180
      %2197 = vst [vmem:[%s224 + $0xf0] sm:$0xff] %v2181
      %2198 = vst [vmem:[%s224 + $0xf8] sm:$0xff] %v2182
      %p2199 = scmp.lt.s32.totalorder %s16, 1
      %s2200 = scalar_select %p2199, %s16, 1
      %s2201 = smul.addr %s2200, 32
      %s2202 = smul.addr %s2201, 8
      %s2203 = scalar_lea.vmem %s5, %s2202
      // Predicated region
      $region41: #{separable_conv_block.1} parent=39 // pred_check
        %p2204 = pneg %p144
      $region42: #{separable_conv_block.1} parent=39 // pred_check_branch
        %2206 = sbr.rel (%p2204) target = $region44
      $region43: #{separable_conv_block.1} parent=39 // pred_region
        _
      $region44: #{separable_conv_block.1} parent=39 // pred_fallthru
        _
    $region40: #{separable_conv_block.1} parent=5 // pred_fallthru
      _
    %p2207 = scmp.le.s32.totalorder 2, %s11
    // Predicated region
    $region45: #{separable_conv_block.1} parent=5 // pred_check
      %p2208 = pneg %p2207
    $region46: #{separable_conv_block.1} parent=5 // pred_check_branch
      %2210 = sbr.rel (%p2208) target = $region48
    $region47: #{separable_conv_block.1} parent=5 // pred_region
      %s2211 = ssub.s32 %s11, 2
      // Predicated region
      $region49: #{separable_conv_block.1} parent=47 // pred_check
        %p2212 = pneg %p150
      $region50: #{separable_conv_block.1} parent=47 // pred_check_branch
        %2214 = sbr.rel (%p2212) target = $region52
      $region51: #{separable_conv_block.1} parent=47 // pred_region
        %p2215 = scmp.lt.s32.totalorder %s17, 1
        %s2216 = scalar_select %p2215, %s17, 1
        %s2217 = smul.addr %s2216, 32
        %s2218 = smul.addr %s2217, 8
        %s2219 = scalar_lea.vmem %s5, %s2218
      $region52: #{separable_conv_block.1} parent=47 // pred_fallthru
        _
    $region48: #{separable_conv_block.1} parent=5 // pred_fallthru
      _
  $region6: #{separable_conv_block.1} parent=0 // loop_footer
    %s15 = sadd.s32 1, %s11
  $region7: #{separable_conv_block.1} parent=0 // loop_footer_branch
    %10 = sbr.rel target = $region3
  $region8: #{separable_conv_block.1} parent=0 // loop_exit
    _

</llo_original>
